<compile_context>
chip_gen: v5e
topology: v5e:2x2
jax: 0.10.0
libtpu: 0.0.40
codegen_flags: <defaults>
</compile_context>

<pallas_src>
import jax
import jax.numpy as jnp
from jax import lax
from jax.experimental import pallas as pl
from jax.experimental.pallas import tpu as pltpu

Keep = 2
Reuse = 1
BN_EPS = 1e-5


# ---------------------------------------------------------------------- Pallas kernel
def _make_fused_block_kernel(N, H, W, C, T, fuse_k):
    """TSM shift -> conv3x3+BN+ReLU -> conv3x3+BN -> +identity -> ReLU.

    Lane-dense layout: activations are (N*H, W*C) with lane index = w*C + c.
    """
    NH, WC = N * H, W * C
    fold = C // 3                                   # args.shift_div = 3
    inv_cnt = 1.0 / float(N * H * W)
    # log2(W) cyclic lane rolls (stride C) sum the W lane-groups of every channel and
    # leave the per-channel total replicated across its W slots (W power of two).
    lane_shifts = [C * (1 << i) for i in range(W.bit_length() - 1)]

    def _per_channel_sum(v):                        # v: (1, WC) f32
        for s in lane_shifts:
            v = v + pltpu.roll(v, shift=s, axis=1)
        return v

    def kernel(x_ref, t1_ref, t2_ref, gb_ref, o_ref):
        # ---- hoisted row / lane masks (built once from iota, no div/mod) -----------
        r = lax.broadcasted_iota(jnp.int32, (NH, 1), 0)
        false = r < 0
        t_first = t_last = h_first = h_last = false
        for n in range(N):                          # static unroll over the N frames
            t = n % T
            in_img = (r >= n * H) & (r < (n + 1) * H)
            if t == 0:
                t_first = t_first | in_img          # first frame of a clip
            if t == T - 1:
                t_last = t_last | in_img            # last frame of a clip
            h_first = h_first | (r == n * H)        # first row of an image
            h_last = h_last | (r == (n + 1) * H - 1)  # last row of an image
        lane = lax.broadcasted_iota(jnp.int32, (1, WC), 1)
        c_idx = lane & (C - 1)                      # lane = w*C + c  (C power of two)
        g_fwd = c_idx < fold                        # channels that take frame t+1
        g_bwd = (c_idx >= fold) & (c_idx < 2 * fold)  # channels that take frame t-1

        # ---- single activation load; TSM temporal shift in registers ---------------
        xf = x_ref[...].astype(jnp.float32)         # (NH, WC); also the residual input
        ztile = jnp.zeros((H, WC), jnp.float32)
        nxt = jnp.concatenate([xf[H:], ztile], axis=0)       # nxt[r] = x[r + H]
        prv = jnp.concatenate([ztile, xf[:NH - H]], axis=0)  # prv[r] = x[r - H]
        nxt = jnp.where(t_last, 0.0, nxt)           # frame t+1 does not exist at t==T-1
        prv = jnp.where(t_first, 0.0, prv)          # frame t-1 does not exist at t==0
        xs = jnp.where(g_fwd, nxt, jnp.where(g_bwd, prv, xf))

        # ---- conv3x3 (block-Toeplitz MXU matmuls) + training-mode BN ----------------
        def conv_bn(inp, t_ref, g, b):
            # H halo: +/-1-row shifted operands (pltpu.roll == jnp.roll: out[i]=in[i-s]),
            # with the first/last row of every image zeroed.  W halo lives inside T.
            dn = jnp.where(h_first, 0.0, pltpu.roll(inp, shift=1, axis=0))      # row r-1
            up = jnp.where(h_last, 0.0, pltpu.roll(inp, shift=NH - 1, axis=0))  # row r+1
            dn = dn.astype(jnp.bfloat16)
            mid = inp.astype(jnp.bfloat16)
            up = up.astype(jnp.bfloat16)
            if fuse_k:
                # v6e / v7x: one K = 3*WC contraction fills the 256-deep MXU.
                acc = jnp.dot(jnp.concatenate([dn, mid, up], axis=1), t_ref[...],
                              preferred_element_type=jnp.float32)
            else:
                # v5e: 128x128 MXU -> one K = WC matmul per kernel row, acc from dot 0.
                acc = jnp.dot(dn, t_ref[pl.ds(0, WC), :],
                              preferred_element_type=jnp.float32)
                acc = acc + jnp.dot(mid, t_ref[pl.ds(WC, WC), :],
                                    preferred_element_type=jnp.float32)
                acc = acc + jnp.dot(up, t_ref[pl.ds(2 * WC, WC), :],
                                    preferred_element_type=jnp.float32)
            # BatchNorm, training-mode batch stats, one pass (biased variance).
            s = _per_channel_sum(jnp.sum(acc, axis=0, keepdims=True))
            ss = _per_channel_sum(jnp.sum(acc * acc, axis=0, keepdims=True))
            mean = s * inv_cnt
            var = ss * inv_cnt - mean * mean
            inv = lax.rsqrt(var + BN_EPS)
            return (acc - mean) * (inv * g) + b

        g1 = gb_ref[pl.ds(0, 1), :]
        b1 = gb_ref[pl.ds(1, 1), :]
        g2 = gb_ref[pl.ds(2, 1), :]
        b2 = gb_ref[pl.ds(3, 1), :]

        y1 = jnp.maximum(conv_bn(xs, t1_ref, g1, b1), 0.0)
        y2 = conv_bn(y1, t2_ref, g2, b2)
        o_ref[...] = jnp.maximum(y2 + xf, 0.0)      # residual uses the UN-shifted x

    return kernel


def _toeplitz_weights(w_hwio, width):
    """HWIO (3,3,Cin,Cout) -> (3, W*Cin, W*Cout) block-Toeplitz matrices.

    T[dy][(wi,ci),(wo,co)] = w[dy, wi-wo+1, ci, co] (zero outside the 3-tap window), so
    an activation row (flattened (w, c)) matmul'd with T[dy] yields the contribution of
    kernel row dy with the W zero-padding built in.
    TODO(synk): tile along W / go banded before production shapes (T is 81% zeros here).
    """
    kh, kw, cin, cout = w_hwio.shape
    shifts = jnp.stack([jnp.eye(width, k=1 - dx, dtype=w_hwio.dtype) for dx in range(kw)])
    t = jnp.einsum("xuv,yxio->yuivo", shifts, w_hwio)       # (dy, wi, ci, wo, co)
    return t.reshape(kh, width * cin, width * cout)


def _mxu_prefers_wide_k():
    """v6e / v7x MXUs are 256 deep -> fuse the three kernel-row matmuls into one
    K=3*W*C contraction.  v5e (and older 128x128 MXUs) keep one K=W*C matmul per row."""
    try:
        kind = jax.devices()[0].device_kind.lower()
    except Exception:
        return True
    return not any(v in kind for v in ("v2", "v3", "v4", "v5"))


def _fused_block_pallas(x_in, t1, t2, gb, N, H, W, C, num_segments, fuse_k):
    NH, WC = N * H, W * C
    vmem = pltpu.MemorySpace.VMEM
    flops = 2 * 2 * NH * WC * (3 * WC)              # two convs in the Toeplitz form
    bytes_accessed = (x_in.size * 2 + t1.size * 2 + t2.size * 2 + gb.size * 4
                      + NH * WC * 4)
    return pl.pallas_call(
        _make_fused_block_kernel(N, H, W, C, num_segments, fuse_k),
        out_shape=jax.ShapeDtypeStruct((NH, WC), jnp.float32),
        in_specs=[pl.BlockSpec(memory_space=vmem) for _ in range(4)],
        out_specs=pl.BlockSpec(memory_space=vmem),
        cost_estimate=pl.CostEstimate(flops=flops, transcendentals=2 * WC,
                                      bytes_accessed=bytes_accessed),
    )(x_in, t1, t2, gb)


# ----------------------------------------------------------------------------- flops
def _conv_out_hw(h, w, k=3, stride=1, pad=1, dil=1):
    ho = (h + 2 * pad - dil * (k - 1) - 1) // stride + 1
    wo = (w + 2 * pad - dil * (k - 1) - 1) // stride + 1
    return ho, wo


# TODO(synk): count_conv2d_flops was not provided upstream; standard MAC-count formula
# consistent with count_dyn_conv2d_flops (bias=0, groups=1).
def count_conv2d_flops_static(input_shape, c_in, c_out, k=3, stride=1, pad=1):
    n, _, h, w = input_shape
    ho, wo = _conv_out_hw(h, w, k, stride, pad)
    flops = n * c_out * ho * wo * (c_in * k * k)
    return float(flops), (n, c_out, ho, wo)


def count_dyn_conv2d_flops_jax(input_shape, c_in, c_out, channels_mask, upstream_conv,
                               k=3, stride=1, pad=1):
    n, _, h_in, w_in = input_shape
    ho, wo = _conv_out_hw(h_in, w_in, k, stride, pad)
    ofm = ho * wo
    frames = channels_mask.shape[1]
    n_clips = n // frames
    out_active_pixels = ofm * jnp.ones((n_clips, frames), jnp.float32)

    if upstream_conv:
        # gate_history == True (pn_num_outputs == 3)
        off_t = (1.0 - channels_mask[:, :-1, :, Keep]) * (1.0 - channels_mask[:, 1:, :, Reuse])
        off_last = 1.0 - channels_mask[:, -1:, :, Keep]
        out_channel_off = jnp.concatenate([off_t, off_last], axis=1)
        out_active_channels = c_out - jnp.sum(out_channel_off, axis=2)
        flops_per_frame = out_active_channels * out_active_pixels * (c_in * k * k)
        flops_ub_mat = c_out * out_active_pixels * (c_in * k * k)
    else:
        in_channel_off = channels_mask[:, :, :, 0]
        in_active_channels = c_in - jnp.sum(in_channel_off, axis=2)
        flops_per_frame = c_out * out_active_pixels * (jnp.floor(in_active_channels) * k * k)
        flops_ub_mat = flops_per_frame

    return flops_per_frame.reshape(-1), jnp.sum(flops_ub_mat, axis=1), (n, c_out, ho, wo)


# ----------------------------------------------------------------------------- forward
def basic_block_forward(x_nchw, flops_in, params, num_segments):
    N, Cin, H, W = x_nchw.shape
    Cout = params["w1"].shape[-1]
    assert Cin == Cout, "stride-1 BasicBlock without downsample has inplanes == planes"
    assert N % num_segments == 0
    WC = W * Cout
    assert WC % 128 == 0, "lane-dense layout assumes W*C is a multiple of 128"
    assert W & (W - 1) == 0, "roll-based per-channel BN reduction assumes W power of two"
    assert Cout & (Cout - 1) == 0, "in-kernel channel-group masks assume C power of two"

    # TODO(synk): keep the activation NHWC / lane-dense across consecutive blocks; the
    # NCHW<->NHWC transposes here exist only to honor the PyTorch interface of one block.
    x_nhwc = jnp.transpose(x_nchw, (0, 2, 3, 1))
    x_in = x_nhwc.reshape(N * H, WC).astype(jnp.bfloat16)   # single bf16 activation input

    t1 = _toeplitz_weights(params["w1"].astype(jnp.float32), W
                           ).reshape(3 * WC, WC).astype(jnp.bfloat16)
    t2 = _toeplitz_weights(params["w2"].astype(jnp.float32), W
                           ).reshape(3 * WC, WC).astype(jnp.bfloat16)
    gb = jnp.stack([jnp.tile(params["g1"].astype(jnp.float32), W),
                    jnp.tile(params["b1"].astype(jnp.float32), W),
                    jnp.tile(params["g2"].astype(jnp.float32), W),
                    jnp.tile(params["b2"].astype(jnp.float32), W)], axis=0)   # (4, WC)

    out_dense = _fused_block_pallas(x_in, t1, t2, gb, N, H, W, Cout,
                                    num_segments, _mxu_prefers_wide_k())
    out_nchw = jnp.transpose(out_dense.reshape(N, H, W, Cout), (0, 3, 1, 2))

    # disable_channelwise_masking: mask = zeros(N, C, 3); mask[:, :, Keep] = 1
    mask = jnp.zeros((N, Cout, 3), jnp.float32).at[:, :, Keep].set(1.0)
    channels_masks = mask.reshape(-1, num_segments, Cout, 3)

    # dynamic-FLOPs bookkeeping (get_flops_per_frame) -- plain JAX scalar bookkeeping.
    f1, ub1, shape1 = count_dyn_conv2d_flops_jax((N, Cin, H, W), Cin, Cout,
                                                 channels_masks, upstream_conv=True)
    f2, ub2, _ = count_dyn_conv2d_flops_jax(shape1, Cout, Cout,
                                            channels_masks, upstream_conv=False)
    flops_frames = f1 + f2
    flops_ub = jnp.sum(ub1 + ub2)[None]
    flops_downsample = jnp.array([0.0], jnp.float32)
    flops_policy = jnp.array([0.0], jnp.float32)            # adaptive_policy == False
    c1_full, s1 = count_conv2d_flops_static((num_segments, Cin, H, W), Cin, Cout)
    c2_full, _ = count_conv2d_flops_static(s1, Cout, Cout)
    flops_full = jnp.array([c1_full + c2_full], jnp.float32)
    flops_blk = jnp.concatenate([flops_frames, flops_ub, flops_downsample,
                                 flops_policy, flops_full])
    flops_out = jnp.concatenate([flops_in, flops_blk[None]], axis=0)

    mask_view = mask.reshape(-1, num_segments, Cout, 3)
    return out_nchw, mask_view, None, flops_out, None


# --------------------------------------------------------------- pure-JAX reference
def _reference_forward(x_nchw, params, num_segments):
    N, C, H, W = x_nchw.shape
    fold = C // 3
    x5 = x_nchw.reshape(N // num_segments, num_segments, C, H, W)
    sh = jnp.zeros_like(x5)
    sh = sh.at[:, :-1, :fold].set(x5[:, 1:, :fold])
    sh = sh.at[:, 1:, fold:2 * fold].set(x5[:, :-1, fold:2 * fold])
    sh = sh.at[:, :, 2 * fold:].set(x5[:, :, 2 * fold:])
    xs = sh.reshape(N, C, H, W)

    def conv_bn(x, w, g, b, relu):
        y = lax.conv_general_dilated(x, w, (1, 1), "SAME",
                                     dimension_numbers=("NCHW", "HWIO", "NCHW"))
        mean = jnp.mean(y, axis=(0, 2, 3), keepdims=True)
        var = jnp.var(y, axis=(0, 2, 3), keepdims=True)
        y = (y - mean) * lax.rsqrt(var + BN_EPS) * g.reshape(1, -1, 1, 1) + b.reshape(1, -1, 1, 1)
        return jnp.maximum(y, 0.0) if relu else y

    y1 = conv_bn(xs, params["w1"], params["g1"], params["b1"], True)
    y2 = conv_bn(y1, params["w2"], params["g2"], params["b2"], False)
    return jnp.maximum(y2 + x_nchw, 0.0)


# ----------------------------------------------------------------------------- main
if __name__ == "__main__":
    T = 4            # args.num_segments
    n_clips = 2
    NT = n_clips * T
    Cin = Cout = 8   # inplanes == planes, stride=1, no downsample
    H = W = 16       # W * C == 128 -> one lane-dense vreg row per activation row

    key = jax.random.PRNGKey(0)
    kx, k1, k2, k3, k4, k5, k6 = jax.random.split(key, 7)
    x = jax.random.normal(kx, (NT, Cin, H, W), jnp.float32)

    # Deterministic parameter init (conv weights HWIO == torch OIHW.permute(2,3,1,0)).
    params = {
        "w1": 0.1 * jax.random.normal(k1, (3, 3, Cin, Cout), jnp.float32),
        "w2": 0.1 * jax.random.normal(k2, (3, 3, Cout, Cout), jnp.float32),
        "g1": 1.0 + 0.1 * jax.random.normal(k3, (Cout,), jnp.float32),
        "b1": 0.1 * jax.random.normal(k4, (Cout,), jnp.float32),
        "g2": 1.0 + 0.1 * jax.random.normal(k5, (Cout,), jnp.float32),
        "b2": 0.1 * jax.random.normal(k6, (Cout,), jnp.float32),
    }
    # NOTE: the module's FBS nn.Linear is only used when args.FBS_scaling_only=True,
    # which is False in this configuration, so it is not instantiated here.

    flops_in = jnp.zeros((1, NT + 4), jnp.float32)

    fwd = jax.jit(basic_block_forward, static_argnames=("num_segments",))
    out, mask, mask2, flops, soft_mask = fwd(x, flops_in, params, num_segments=T)
    jax.block_until_ready(out)
    jax.block_until_ready(flops)

    assert out.shape == (NT, Cout, H, W)
    assert mask.shape == (n_clips, T, Cout, 3)
    assert flops.shape == (2, NT + 4)

    # Numeric cross-check against the pure-JAX reference (bf16 MXU operands + one-pass
    # BN batch stats keep the kernel within a few 1e-2 of the f32 reference).
    ref = _reference_forward(x, params, T)
    max_err = float(jnp.max(jnp.abs(out - ref)))
    assert max_err < 0.1, f"kernel/reference mismatch: max abs err = {max_err}"

    print("KERNEL_OK")
</pallas_src>

<mosaic_0001>
module attributes {stable_mosaic.version = 11 : i64} {
  func.func @kernel(%arg0: memref<128x128xbf16, #tpu.memory_space<vmem>>, %arg1: memref<384x128xbf16, #tpu.memory_space<vmem>>, %arg2: memref<384x128xbf16, #tpu.memory_space<vmem>>, %arg3: memref<4x128xf32, #tpu.memory_space<vmem>>, %arg4: memref<128x128xf32, #tpu.memory_space<vmem>>) attributes {dimension_semantics = [], scalar_prefetch = 0 : i64, scratch_operands = 0 : i64, tpu.core_type = #tpu.core_type<tc>} {
    %0 = tpu.iota {dimensions = array<i32: 0>} : vector<128x1xi32>
    %c0_i32 = arith.constant 0 : i32
    %1 = vector.broadcast %c0_i32 : i32 to vector<128x1xi32>
    %2 = arith.cmpi slt, %0, %1 : vector<128x1xi32>
    %c0_i32_0 = arith.constant 0 : i32
    %3 = vector.broadcast %c0_i32_0 : i32 to vector<128x1xi32>
    %4 = arith.cmpi sge, %0, %3 : vector<128x1xi32>
    %c16_i32 = arith.constant 16 : i32
    %5 = vector.broadcast %c16_i32 : i32 to vector<128x1xi32>
    %6 = arith.cmpi slt, %0, %5 : vector<128x1xi32>
    %7 = arith.andi %4, %6 : vector<128x1xi1>
    %8 = arith.ori %2, %7 : vector<128x1xi1>
    %c0_i32_1 = arith.constant 0 : i32
    %9 = vector.broadcast %c0_i32_1 : i32 to vector<128x1xi32>
    %10 = arith.cmpi eq, %0, %9 : vector<128x1xi32>
    %11 = arith.ori %2, %10 : vector<128x1xi1>
    %c15_i32 = arith.constant 15 : i32
    %12 = vector.broadcast %c15_i32 : i32 to vector<128x1xi32>
    %13 = arith.cmpi eq, %0, %12 : vector<128x1xi32>
    %14 = arith.ori %2, %13 : vector<128x1xi1>
    %c16_i32_2 = arith.constant 16 : i32
    %15 = vector.broadcast %c16_i32_2 : i32 to vector<128x1xi32>
    %16 = arith.cmpi eq, %0, %15 : vector<128x1xi32>
    %17 = arith.ori %11, %16 : vector<128x1xi1>
    %c31_i32 = arith.constant 31 : i32
    %18 = vector.broadcast %c31_i32 : i32 to vector<128x1xi32>
    %19 = arith.cmpi eq, %0, %18 : vector<128x1xi32>
    %20 = arith.ori %14, %19 : vector<128x1xi1>
    %c32_i32 = arith.constant 32 : i32
    %21 = vector.broadcast %c32_i32 : i32 to vector<128x1xi32>
    %22 = arith.cmpi eq, %0, %21 : vector<128x1xi32>
    %23 = arith.ori %17, %22 : vector<128x1xi1>
    %c47_i32 = arith.constant 47 : i32
    %24 = vector.broadcast %c47_i32 : i32 to vector<128x1xi32>
    %25 = arith.cmpi eq, %0, %24 : vector<128x1xi32>
    %26 = arith.ori %20, %25 : vector<128x1xi1>
    %c48_i32 = arith.constant 48 : i32
    %27 = vector.broadcast %c48_i32 : i32 to vector<128x1xi32>
    %28 = arith.cmpi sge, %0, %27 : vector<128x1xi32>
    %c64_i32 = arith.constant 64 : i32
    %29 = vector.broadcast %c64_i32 : i32 to vector<128x1xi32>
    %30 = arith.cmpi slt, %0, %29 : vector<128x1xi32>
    %31 = arith.andi %28, %30 : vector<128x1xi1>
    %32 = arith.ori %2, %31 : vector<128x1xi1>
    %c48_i32_3 = arith.constant 48 : i32
    %33 = vector.broadcast %c48_i32_3 : i32 to vector<128x1xi32>
    %34 = arith.cmpi eq, %0, %33 : vector<128x1xi32>
    %35 = arith.ori %23, %34 : vector<128x1xi1>
    %c63_i32 = arith.constant 63 : i32
    %36 = vector.broadcast %c63_i32 : i32 to vector<128x1xi32>
    %37 = arith.cmpi eq, %0, %36 : vector<128x1xi32>
    %38 = arith.ori %26, %37 : vector<128x1xi1>
    %c64_i32_4 = arith.constant 64 : i32
    %39 = vector.broadcast %c64_i32_4 : i32 to vector<128x1xi32>
    %40 = arith.cmpi sge, %0, %39 : vector<128x1xi32>
    %c80_i32 = arith.constant 80 : i32
    %41 = vector.broadcast %c80_i32 : i32 to vector<128x1xi32>
    %42 = arith.cmpi slt, %0, %41 : vector<128x1xi32>
    %43 = arith.andi %40, %42 : vector<128x1xi1>
    %44 = arith.ori %8, %43 : vector<128x1xi1>
    %c64_i32_5 = arith.constant 64 : i32
    %45 = vector.broadcast %c64_i32_5 : i32 to vector<128x1xi32>
    %46 = arith.cmpi eq, %0, %45 : vector<128x1xi32>
    %47 = arith.ori %35, %46 : vector<128x1xi1>
    %c79_i32 = arith.constant 79 : i32
    %48 = vector.broadcast %c79_i32 : i32 to vector<128x1xi32>
    %49 = arith.cmpi eq, %0, %48 : vector<128x1xi32>
    %50 = arith.ori %38, %49 : vector<128x1xi1>
    %c80_i32_6 = arith.constant 80 : i32
    %51 = vector.broadcast %c80_i32_6 : i32 to vector<128x1xi32>
    %52 = arith.cmpi eq, %0, %51 : vector<128x1xi32>
    %53 = arith.ori %47, %52 : vector<128x1xi1>
    %c95_i32 = arith.constant 95 : i32
    %54 = vector.broadcast %c95_i32 : i32 to vector<128x1xi32>
    %55 = arith.cmpi eq, %0, %54 : vector<128x1xi32>
    %56 = arith.ori %50, %55 : vector<128x1xi1>
    %c96_i32 = arith.constant 96 : i32
    %57 = vector.broadcast %c96_i32 : i32 to vector<128x1xi32>
    %58 = arith.cmpi eq, %0, %57 : vector<128x1xi32>
    %59 = arith.ori %53, %58 : vector<128x1xi1>
    %c111_i32 = arith.constant 111 : i32
    %60 = vector.broadcast %c111_i32 : i32 to vector<128x1xi32>
    %61 = arith.cmpi eq, %0, %60 : vector<128x1xi32>
    %62 = arith.ori %56, %61 : vector<128x1xi1>
    %c112_i32 = arith.constant 112 : i32
    %63 = vector.broadcast %c112_i32 : i32 to vector<128x1xi32>
    %64 = arith.cmpi sge, %0, %63 : vector<128x1xi32>
    %c128_i32 = arith.constant 128 : i32
    %65 = vector.broadcast %c128_i32 : i32 to vector<128x1xi32>
    %66 = arith.cmpi slt, %0, %65 : vector<128x1xi32>
    %67 = arith.andi %64, %66 : vector<128x1xi1>
    %68 = arith.ori %32, %67 : vector<128x1xi1>
    %c112_i32_7 = arith.constant 112 : i32
    %69 = vector.broadcast %c112_i32_7 : i32 to vector<128x1xi32>
    %70 = arith.cmpi eq, %0, %69 : vector<128x1xi32>
    %71 = arith.ori %59, %70 : vector<128x1xi1>
    %c127_i32 = arith.constant 127 : i32
    %72 = vector.broadcast %c127_i32 : i32 to vector<128x1xi32>
    %73 = arith.cmpi eq, %0, %72 : vector<128x1xi32>
    %74 = arith.ori %62, %73 : vector<128x1xi1>
    %75 = tpu.iota {dimensions = array<i32: 1>} : vector<1x128xi32>
    %c7_i32 = arith.constant 7 : i32
    %76 = vector.broadcast %c7_i32 : i32 to vector<1x128xi32>
    %77 = arith.andi %75, %76 : vector<1x128xi32>
    %c2_i32 = arith.constant 2 : i32
    %78 = vector.broadcast %c2_i32 : i32 to vector<1x128xi32>
    %79 = arith.cmpi slt, %77, %78 : vector<1x128xi32>
    %c2_i32_8 = arith.constant 2 : i32
    %80 = vector.broadcast %c2_i32_8 : i32 to vector<1x128xi32>
    %81 = arith.cmpi sge, %77, %80 : vector<1x128xi32>
    %c4_i32 = arith.constant 4 : i32
    %82 = vector.broadcast %c4_i32 : i32 to vector<1x128xi32>
    %83 = arith.cmpi slt, %77, %82 : vector<1x128xi32>
    %84 = arith.andi %81, %83 : vector<1x128xi1>
    %c0 = arith.constant 0 : index
    %c0_9 = arith.constant 0 : index
    %85 = vector.load %arg0[%c0, %c0_9] : memref<128x128xbf16, #tpu.memory_space<vmem>>, vector<128x128xbf16>
    %86 = arith.extf %85 : vector<128x128xbf16> to vector<128x128xf32>
    %cst = arith.constant 0.000000e+00 : f32
    %87 = vector.broadcast %cst : f32 to vector<16x128xf32>
    %88 = vector.extract_strided_slice %86 {offsets = [16, 0], sizes = [112, 128], strides = [1, 1]} : vector<128x128xf32> to vector<112x128xf32>
    %89 = tpu.concatenate %88, %87 in 0 : vector<112x128xf32>, vector<16x128xf32> -> vector<128x128xf32>
    %90 = vector.extract_strided_slice %86 {offsets = [0, 0], sizes = [112, 128], strides = [1, 1]} : vector<128x128xf32> to vector<112x128xf32>
    %91 = tpu.concatenate %87, %90 in 0 : vector<16x128xf32>, vector<112x128xf32> -> vector<128x128xf32>
    %cst_10 = arith.constant 0.000000e+00 : f32
    %92 = vector.shape_cast %68 : vector<128x1xi1> to vector<128x1xi1>
    %93 = vector.broadcast %92 : vector<128x1xi1> to vector<128x128xi1>
    %94 = vector.broadcast %cst_10 : f32 to vector<128x128xf32>
    %95 = arith.select %93, %94, %89 : vector<128x128xi1>, vector<128x128xf32>
    %cst_11 = arith.constant 0.000000e+00 : f32
    %96 = vector.shape_cast %44 : vector<128x1xi1> to vector<128x1xi1>
    %97 = vector.broadcast %96 : vector<128x1xi1> to vector<128x128xi1>
    %98 = vector.broadcast %cst_11 : f32 to vector<128x128xf32>
    %99 = arith.select %97, %98, %91 : vector<128x128xi1>, vector<128x128xf32>
    %100 = vector.shape_cast %84 : vector<1x128xi1> to vector<1x128xi1>
    %101 = vector.broadcast %100 : vector<1x128xi1> to vector<128x128xi1>
    %102 = arith.select %101, %99, %86 : vector<128x128xi1>, vector<128x128xf32>
    %103 = vector.shape_cast %79 : vector<1x128xi1> to vector<1x128xi1>
    %104 = vector.broadcast %103 : vector<1x128xi1> to vector<128x128xi1>
    %105 = arith.select %104, %95, %102 : vector<128x128xi1>, vector<128x128xf32>
    %c0_12 = arith.constant 0 : index
    %c0_13 = arith.constant 0 : index
    %106 = vector.load %arg3[%c0_12, %c0_13] : memref<4x128xf32, #tpu.memory_space<vmem>>, vector<1x128xf32>
    %c1 = arith.constant 1 : index
    %c0_14 = arith.constant 0 : index
    %107 = vector.load %arg3[%c1, %c0_14] : memref<4x128xf32, #tpu.memory_space<vmem>>, vector<1x128xf32>
    %c2 = arith.constant 2 : index
    %c0_15 = arith.constant 0 : index
    %108 = vector.load %arg3[%c2, %c0_15] : memref<4x128xf32, #tpu.memory_space<vmem>>, vector<1x128xf32>
    %c3 = arith.constant 3 : index
    %c0_16 = arith.constant 0 : index
    %109 = vector.load %arg3[%c3, %c0_16] : memref<4x128xf32, #tpu.memory_space<vmem>>, vector<1x128xf32>
    %c1_i32 = arith.constant 1 : i32
    %110 = tpu.dynamic_rotate %105 by %c1_i32 dim 0 : vector<128x128xf32>, i32 -> vector<128x128xf32>
    %cst_17 = arith.constant 0.000000e+00 : f32
    %111 = vector.shape_cast %71 : vector<128x1xi1> to vector<128x1xi1>
    %112 = vector.broadcast %111 : vector<128x1xi1> to vector<128x128xi1>
    %113 = vector.broadcast %cst_17 : f32 to vector<128x128xf32>
    %114 = arith.select %112, %113, %110 : vector<128x128xi1>, vector<128x128xf32>
    %c127_i32_18 = arith.constant 127 : i32
    %115 = tpu.dynamic_rotate %105 by %c127_i32_18 dim 0 : vector<128x128xf32>, i32 -> vector<128x128xf32>
    %cst_19 = arith.constant 0.000000e+00 : f32
    %116 = vector.shape_cast %74 : vector<128x1xi1> to vector<128x1xi1>
    %117 = vector.broadcast %116 : vector<128x1xi1> to vector<128x128xi1>
    %118 = vector.broadcast %cst_19 : f32 to vector<128x128xf32>
    %119 = arith.select %117, %118, %115 : vector<128x128xi1>, vector<128x128xf32>
    %120 = arith.truncf %114 : vector<128x128xf32> to vector<128x128xbf16>
    %121 = arith.truncf %105 : vector<128x128xf32> to vector<128x128xbf16>
    %122 = arith.truncf %119 : vector<128x128xf32> to vector<128x128xbf16>
    %123 = tpu.concatenate %120, %121, %122 in 1 : vector<128x128xbf16>, vector<128x128xbf16>, vector<128x128xbf16> -> vector<128x384xbf16>
    %c0_20 = arith.constant 0 : index
    %c0_21 = arith.constant 0 : index
    %124 = vector.load %arg1[%c0_20, %c0_21] : memref<384x128xbf16, #tpu.memory_space<vmem>>, vector<384x128xbf16>
    %cst_22 = arith.constant dense<0.000000e+00> : vector<128x128xf32>
    %125 = tpu.matmul %123, %124, %cst_22 {dimension_numbers = #tpu.dot_dimension_numbers<[1], [0], [0], [1], [0, 0, 1, 1], [], []>} : vector<128x384xbf16>, vector<384x128xbf16>, vector<128x128xf32> -> vector<128x128xf32>
    %cst_23 = arith.constant dense<0.000000e+00> : vector<128xf32>
    %126 = vector.multi_reduction <add>, %125, %cst_23 [0] : vector<128x128xf32> to vector<128xf32>
    %127 = vector.shape_cast %126 : vector<128xf32> to vector<1x128xf32>
    %c8_i32 = arith.constant 8 : i32
    %128 = tpu.dynamic_rotate %127 by %c8_i32 dim 1 : vector<1x128xf32>, i32 -> vector<1x128xf32>
    %129 = arith.addf %127, %128 : vector<1x128xf32>
    %c16_i32_24 = arith.constant 16 : i32
    %130 = tpu.dynamic_rotate %129 by %c16_i32_24 dim 1 : vector<1x128xf32>, i32 -> vector<1x128xf32>
    %131 = arith.addf %129, %130 : vector<1x128xf32>
    %c32_i32_25 = arith.constant 32 : i32
    %132 = tpu.dynamic_rotate %131 by %c32_i32_25 dim 1 : vector<1x128xf32>, i32 -> vector<1x128xf32>
    %133 = arith.addf %131, %132 : vector<1x128xf32>
    %c64_i32_26 = arith.constant 64 : i32
    %134 = tpu.dynamic_rotate %133 by %c64_i32_26 dim 1 : vector<1x128xf32>, i32 -> vector<1x128xf32>
    %135 = arith.addf %133, %134 : vector<1x128xf32>
    %136 = arith.mulf %125, %125 : vector<128x128xf32>
    %cst_27 = arith.constant dense<0.000000e+00> : vector<128xf32>
    %137 = vector.multi_reduction <add>, %136, %cst_27 [0] : vector<128x128xf32> to vector<128xf32>
    %138 = vector.shape_cast %137 : vector<128xf32> to vector<1x128xf32>
    %c8_i32_28 = arith.constant 8 : i32
    %139 = tpu.dynamic_rotate %138 by %c8_i32_28 dim 1 : vector<1x128xf32>, i32 -> vector<1x128xf32>
    %140 = arith.addf %138, %139 : vector<1x128xf32>
    %c16_i32_29 = arith.constant 16 : i32
    %141 = tpu.dynamic_rotate %140 by %c16_i32_29 dim 1 : vector<1x128xf32>, i32 -> vector<1x128xf32>
    %142 = arith.addf %140, %141 : vector<1x128xf32>
    %c32_i32_30 = arith.constant 32 : i32
    %143 = tpu.dynamic_rotate %142 by %c32_i32_30 dim 1 : vector<1x128xf32>, i32 -> vector<1x128xf32>
    %144 = arith.addf %142, %143 : vector<1x128xf32>
    %c64_i32_31 = arith.constant 64 : i32
    %145 = tpu.dynamic_rotate %144 by %c64_i32_31 dim 1 : vector<1x128xf32>, i32 -> vector<1x128xf32>
    %146 = arith.addf %144, %145 : vector<1x128xf32>
    %cst_32 = arith.constant 4.8828125E-4 : f32
    %147 = vector.broadcast %cst_32 : f32 to vector<1x128xf32>
    %148 = arith.mulf %135, %147 : vector<1x128xf32>
    %cst_33 = arith.constant 4.8828125E-4 : f32
    %149 = vector.broadcast %cst_33 : f32 to vector<1x128xf32>
    %150 = arith.mulf %146, %149 : vector<1x128xf32>
    %151 = arith.mulf %148, %148 : vector<1x128xf32>
    %152 = arith.subf %150, %151 : vector<1x128xf32>
    %cst_34 = arith.constant 9.99999974E-6 : f32
    %153 = vector.broadcast %cst_34 : f32 to vector<1x128xf32>
    %154 = arith.addf %152, %153 : vector<1x128xf32>
    %155 = math.rsqrt %154 : vector<1x128xf32>
    %156 = vector.broadcast %148 : vector<1x128xf32> to vector<128x128xf32>
    %157 = arith.subf %125, %156 : vector<128x128xf32>
    %158 = arith.mulf %155, %106 : vector<1x128xf32>
    %159 = vector.broadcast %158 : vector<1x128xf32> to vector<128x128xf32>
    %160 = arith.mulf %157, %159 : vector<128x128xf32>
    %161 = vector.broadcast %107 : vector<1x128xf32> to vector<128x128xf32>
    %162 = arith.addf %160, %161 : vector<128x128xf32>
    %cst_35 = arith.constant 0.000000e+00 : f32
    %163 = vector.broadcast %cst_35 : f32 to vector<128x128xf32>
    %164 = arith.maximumf %162, %163 : vector<128x128xf32>
    %c1_i32_36 = arith.constant 1 : i32
    %165 = tpu.dynamic_rotate %164 by %c1_i32_36 dim 0 : vector<128x128xf32>, i32 -> vector<128x128xf32>
    %cst_37 = arith.constant 0.000000e+00 : f32
    %166 = vector.shape_cast %71 : vector<128x1xi1> to vector<128x1xi1>
    %167 = vector.broadcast %166 : vector<128x1xi1> to vector<128x128xi1>
    %168 = vector.broadcast %cst_37 : f32 to vector<128x128xf32>
    %169 = arith.select %167, %168, %165 : vector<128x128xi1>, vector<128x128xf32>
    %c127_i32_38 = arith.constant 127 : i32
    %170 = tpu.dynamic_rotate %164 by %c127_i32_38 dim 0 : vector<128x128xf32>, i32 -> vector<128x128xf32>
    %cst_39 = arith.constant 0.000000e+00 : f32
    %171 = vector.shape_cast %74 : vector<128x1xi1> to vector<128x1xi1>
    %172 = vector.broadcast %171 : vector<128x1xi1> to vector<128x128xi1>
    %173 = vector.broadcast %cst_39 : f32 to vector<128x128xf32>
    %174 = arith.select %172, %173, %170 : vector<128x128xi1>, vector<128x128xf32>
    %175 = arith.truncf %169 : vector<128x128xf32> to vector<128x128xbf16>
    %176 = arith.truncf %164 : vector<128x128xf32> to vector<128x128xbf16>
    %177 = arith.truncf %174 : vector<128x128xf32> to vector<128x128xbf16>
    %178 = tpu.concatenate %175, %176, %177 in 1 : vector<128x128xbf16>, vector<128x128xbf16>, vector<128x128xbf16> -> vector<128x384xbf16>
    %c0_40 = arith.constant 0 : index
    %c0_41 = arith.constant 0 : index
    %179 = vector.load %arg2[%c0_40, %c0_41] : memref<384x128xbf16, #tpu.memory_space<vmem>>, vector<384x128xbf16>
    %cst_42 = arith.constant dense<0.000000e+00> : vector<128x128xf32>
    %180 = tpu.matmul %178, %179, %cst_42 {dimension_numbers = #tpu.dot_dimension_numbers<[1], [0], [0], [1], [0, 0, 1, 1], [], []>} : vector<128x384xbf16>, vector<384x128xbf16>, vector<128x128xf32> -> vector<128x128xf32>
    %cst_43 = arith.constant dense<0.000000e+00> : vector<128xf32>
    %181 = vector.multi_reduction <add>, %180, %cst_43 [0] : vector<128x128xf32> to vector<128xf32>
    %182 = vector.shape_cast %181 : vector<128xf32> to vector<1x128xf32>
    %c8_i32_44 = arith.constant 8 : i32
    %183 = tpu.dynamic_rotate %182 by %c8_i32_44 dim 1 : vector<1x128xf32>, i32 -> vector<1x128xf32>
    %184 = arith.addf %182, %183 : vector<1x128xf32>
    %c16_i32_45 = arith.constant 16 : i32
    %185 = tpu.dynamic_rotate %184 by %c16_i32_45 dim 1 : vector<1x128xf32>, i32 -> vector<1x128xf32>
    %186 = arith.addf %184, %185 : vector<1x128xf32>
    %c32_i32_46 = arith.constant 32 : i32
    %187 = tpu.dynamic_rotate %186 by %c32_i32_46 dim 1 : vector<1x128xf32>, i32 -> vector<1x128xf32>
    %188 = arith.addf %186, %187 : vector<1x128xf32>
    %c64_i32_47 = arith.constant 64 : i32
    %189 = tpu.dynamic_rotate %188 by %c64_i32_47 dim 1 : vector<1x128xf32>, i32 -> vector<1x128xf32>
    %190 = arith.addf %188, %189 : vector<1x128xf32>
    %191 = arith.mulf %180, %180 : vector<128x128xf32>
    %cst_48 = arith.constant dense<0.000000e+00> : vector<128xf32>
    %192 = vector.multi_reduction <add>, %191, %cst_48 [0] : vector<128x128xf32> to vector<128xf32>
    %193 = vector.shape_cast %192 : vector<128xf32> to vector<1x128xf32>
    %c8_i32_49 = arith.constant 8 : i32
    %194 = tpu.dynamic_rotate %193 by %c8_i32_49 dim 1 : vector<1x128xf32>, i32 -> vector<1x128xf32>
    %195 = arith.addf %193, %194 : vector<1x128xf32>
    %c16_i32_50 = arith.constant 16 : i32
    %196 = tpu.dynamic_rotate %195 by %c16_i32_50 dim 1 : vector<1x128xf32>, i32 -> vector<1x128xf32>
    %197 = arith.addf %195, %196 : vector<1x128xf32>
    %c32_i32_51 = arith.constant 32 : i32
    %198 = tpu.dynamic_rotate %197 by %c32_i32_51 dim 1 : vector<1x128xf32>, i32 -> vector<1x128xf32>
    %199 = arith.addf %197, %198 : vector<1x128xf32>
    %c64_i32_52 = arith.constant 64 : i32
    %200 = tpu.dynamic_rotate %199 by %c64_i32_52 dim 1 : vector<1x128xf32>, i32 -> vector<1x128xf32>
    %201 = arith.addf %199, %200 : vector<1x128xf32>
    %cst_53 = arith.constant 4.8828125E-4 : f32
    %202 = vector.broadcast %cst_53 : f32 to vector<1x128xf32>
    %203 = arith.mulf %190, %202 : vector<1x128xf32>
    %cst_54 = arith.constant 4.8828125E-4 : f32
    %204 = vector.broadcast %cst_54 : f32 to vector<1x128xf32>
    %205 = arith.mulf %201, %204 : vector<1x128xf32>
    %206 = arith.mulf %203, %203 : vector<1x128xf32>
    %207 = arith.subf %205, %206 : vector<1x128xf32>
    %cst_55 = arith.constant 9.99999974E-6 : f32
    %208 = vector.broadcast %cst_55 : f32 to vector<1x128xf32>
    %209 = arith.addf %207, %208 : vector<1x128xf32>
    %210 = math.rsqrt %209 : vector<1x128xf32>
    %211 = vector.broadcast %203 : vector<1x128xf32> to vector<128x128xf32>
    %212 = arith.subf %180, %211 : vector<128x128xf32>
    %213 = arith.mulf %210, %108 : vector<1x128xf32>
    %214 = vector.broadcast %213 : vector<1x128xf32> to vector<128x128xf32>
    %215 = arith.mulf %212, %214 : vector<128x128xf32>
    %216 = vector.broadcast %109 : vector<1x128xf32> to vector<128x128xf32>
    %217 = arith.addf %215, %216 : vector<128x128xf32>
    %218 = arith.addf %217, %86 : vector<128x128xf32>
    %cst_56 = arith.constant 0.000000e+00 : f32
    %219 = vector.broadcast %cst_56 : f32 to vector<128x128xf32>
    %220 = arith.maximumf %218, %219 : vector<128x128xf32>
    %c0_57 = arith.constant 0 : index
    %c0_58 = arith.constant 0 : index
    %221 = vector.load %arg4[%c0_57, %c0_58] : memref<128x128xf32, #tpu.memory_space<vmem>>, vector<128x128xf32>
    tpu.vector_store %arg4[%c0_57, %c0_58], %220 {strides = array<i32>} : memref<128x128xf32, #tpu.memory_space<vmem>>, vector<128x128xf32>,
    return
  }
}

</mosaic_0001>

<llo_original>
// kernel: tile.23
$region0: #{tile.23}
  #allocation0 [shape = 's32[1]{0}', space=sflag, size = 0x4, scoped, tag = 'scoped memory for tile.23']
  %s0 = inlined_call_operand.vmem [shape: f32[8], index: 0, kind: input, shape index: {}]
  %s1 = inlined_call_operand.vmem [shape: f32[16,8], index: 1, kind: output, shape index: {}]
  // Predicated region
  $region2: #{tile.23} parent=0 // pred_check
    _
  $region3: #{tile.23} parent=0 // pred_check_branch
    %3 = sbr.rel (0) target = $region5
  $region4: #{tile.23} parent=0 // pred_region
    _
  $region5: #{tile.23} parent=0 // pred_fallthru
    _
  %v4 = vld [vmem:[%s0] ss:$0 sm:$0xff]
  %5 = vst [vmem:[%s1] sm:$0xff] %v4
  %s6 = scalar_lea.vmem %s1, 8
  %7 = vst [vmem:[%s6] sm:$0xff] %v4

// kernel: tile.36
$region0: #{tile.36}
  %s0 = inlined_call_operand.vmem [shape: f32[16,8], index: 0, kind: input, shape index: {}]
  %s1 = inlined_call_operand.vmem [shape: f32[1,128], index: 1, kind: output, shape index: {}]
  $region1: #{tile.36} parent=0
    #allocation0 [shape = 'u8[4096]{0}', space=vmem, size = 0x1000, scoped, tag = 'scoped mem for output reshape']
    %v2 = vld [vmem:[%s0] sm:$0x1]
    %vm3 = vcmask 64512
    %4 = vst.msk [vmem:[#allocation0] sm:$0x1] %vm3, %v2
    %s5 = scalar_lea.vmem %s0, 15
    %v6 = vld [vmem:[%s5] sm:$0x1]
    %7 = vrot.lane.b32.xlu0 %v6, 120
    %v8 = vpop.permute.xlu0 %7
    %vm9 = vcmask 1048512
    %10 = vst.msk [vmem:[#allocation0] sm:$0x1] %vm9, %v8
    %s11 = scalar_lea.vmem %s0, 14
    %v12 = vld [vmem:[%s11] sm:$0x1]
    %13 = vrot.lane.b32.xlu0 %v12, 112
    %v14 = vpop.permute.xlu0 %13
    %vm15 = vcmask 982912
    %16 = vst.msk [vmem:[#allocation0] sm:$0x1] %vm15, %v14
    %s17 = scalar_lea.vmem %s0, 13
    %v18 = vld [vmem:[%s17] sm:$0x1]
    %19 = vrot.lane.b32.xlu0 %v18, 104
    %v20 = vpop.permute.xlu0 %19
    %vm21 = vcmask 917312
    %22 = vst.msk [vmem:[#allocation0] sm:$0x1] %vm21, %v20
    %s23 = scalar_lea.vmem %s0, 12
    %v24 = vld [vmem:[%s23] sm:$0x1]
    %25 = vrot.lane.b32.xlu0 %v24, 96
    %v26 = vpop.permute.xlu0 %25
    %vm27 = vcmask 851712
    %28 = vst.msk [vmem:[#allocation0] sm:$0x1] %vm27, %v26
    %s29 = scalar_lea.vmem %s0, 11
    %v30 = vld [vmem:[%s29] sm:$0x1]
    %31 = vrot.lane.b32.xlu0 %v30, 88
    %v32 = vpop.permute.xlu0 %31
    %vm33 = vcmask 786112
    %34 = vst.msk [vmem:[#allocation0] sm:$0x1] %vm33, %v32
    %s35 = scalar_lea.vmem %s0, 10
    %v36 = vld [vmem:[%s35] sm:$0x1]
    %37 = vrot.lane.b32.xlu0 %v36, 80
    %v38 = vpop.permute.xlu0 %37
    %vm39 = vcmask 720512
    %40 = vst.msk [vmem:[#allocation0] sm:$0x1] %vm39, %v38
    %s41 = scalar_lea.vmem %s0, 9
    %v42 = vld [vmem:[%s41] sm:$0x1]
    %43 = vrot.lane.b32.xlu0 %v42, 72
    %v44 = vpop.permute.xlu0 %43
    %vm45 = vcmask 654912
    %46 = vst.msk [vmem:[#allocation0] sm:$0x1] %vm45, %v44
    %s47 = scalar_lea.vmem %s0, 8
    %v48 = vld [vmem:[%s47] sm:$0x1]
    %49 = vrot.lane.b32.xlu0 %v48, 64
    %v50 = vpop.permute.xlu0 %49
    %vm51 = vcmask 589312
    %52 = vst.msk [vmem:[#allocation0] sm:$0x1] %vm51, %v50
    %s53 = scalar_lea.vmem %s0, 7
    %v54 = vld [vmem:[%s53] sm:$0x1]
    %55 = vrot.lane.b32.xlu0 %v54, 56
    %v56 = vpop.permute.xlu0 %55
    %vm57 = vcmask 523712
    %58 = vst.msk [vmem:[#allocation0] sm:$0x1] %vm57, %v56
    %s59 = scalar_lea.vmem %s0, 6
    %v60 = vld [vmem:[%s59] sm:$0x1]
    %61 = vrot.lane.b32.xlu0 %v60, 48
    %v62 = vpop.permute.xlu0 %61
    %vm63 = vcmask 458112
    %64 = vst.msk [vmem:[#allocation0] sm:$0x1] %vm63, %v62
    %s65 = scalar_lea.vmem %s0, 5
    %v66 = vld [vmem:[%s65] sm:$0x1]
    %67 = vrot.lane.b32.xlu0 %v66, 40
    %v68 = vpop.permute.xlu0 %67
    %vm69 = vcmask 392512
    %70 = vst.msk [vmem:[#allocation0] sm:$0x1] %vm69, %v68
    %s71 = scalar_lea.vmem %s0, 4
    %v72 = vld [vmem:[%s71] sm:$0x1]
    %73 = vrot.lane.b32.xlu0 %v72, 32
    %v74 = vpop.permute.xlu0 %73
    %vm75 = vcmask 326912
    %76 = vst.msk [vmem:[#allocation0] sm:$0x1] %vm75, %v74
    %s77 = scalar_lea.vmem %s0, 3
    %v78 = vld [vmem:[%s77] sm:$0x1]
    %79 = vrot.lane.b32.xlu0 %v78, 24
    %v80 = vpop.permute.xlu0 %79
    %vm81 = vcmask 261312
    %82 = vst.msk [vmem:[#allocation0] sm:$0x1] %vm81, %v80
    %s83 = scalar_lea.vmem %s0, 2
    %v84 = vld [vmem:[%s83] sm:$0x1]
    %85 = vrot.lane.b32.xlu0 %v84, 16
    %v86 = vpop.permute.xlu0 %85
    %vm87 = vcmask 195712
    %88 = vst.msk [vmem:[#allocation0] sm:$0x1] %vm87, %v86
    %s89 = scalar_lea.vmem %s0, 1
    %v90 = vld [vmem:[%s89] sm:$0x1]
    %91 = vrot.lane.b32.xlu0 %v90, 8
    %v92 = vpop.permute.xlu0 %91
    %vm93 = vcmask 130112
    %94 = vst.msk [vmem:[#allocation0] sm:$0x1] %vm93, %v92
    %s96 = ssub.s32 2, 1
    %v97 = vld [vmem:[#allocation0] sm:%s96]
    %s99 = ssub.s32 2, 1
    %100 = vst [vmem:[%s1] sm:%s99] %v97

// kernel: basic_block_forward.1
$region0: #{basic_block_forward.1}
  #allocation0 [shape = 'u32[]', space=smem, size = 0x4, offset = 0x4, fixed_abs, tag = 'smem constant byte address 0x4 - core index']
  #allocation1 [shape = 'u32[72,128]{1,0:T(1,128)}', space=vmem, size = 0x9000, scoped, tag = 'internal scratch']
  %s0 = inlined_call_operand.vmem [shape: bf16[128,128], index: 0, kind: input, shape index: {}]
  %s1 = inlined_call_operand.vmem [shape: bf16[384,128], index: 1, kind: input, shape index: {}]
  %s2 = inlined_call_operand.vmem [shape: bf16[384,128], index: 2, kind: input, shape index: {}]
  %s3 = inlined_call_operand.vmem [shape: f32[4,128], index: 3, kind: input, shape index: {}]
  %s4 = inlined_call_operand.vmem [shape: f32[128,128], index: 4, kind: output, shape index: {}]
  %s5 = sld [smem:[#allocation0]]
  $region26: #{basic_block_forward.1} parent=0
    _
  %s7 = ssub.s32 1, %s5
  %s8 = scalar_select 0, %s7, %s5
  // Predicated region
  $region2: #{basic_block_forward.1} parent=0 // pred_check
    _
  $region3: #{basic_block_forward.1} parent=0 // pred_check_branch
    %10 = sbr.rel (0) target = $region5
  $region4: #{basic_block_forward.1} parent=0 // pred_region
    _
  $region5: #{basic_block_forward.1} parent=0 // pred_fallthru
    _
  // Predicated region
  $region6: #{basic_block_forward.1} parent=0 // pred_check
    _
  $region7: #{basic_block_forward.1} parent=0 // pred_check_branch
    %12 = sbr.rel (0) target = $region9
  $region8: #{basic_block_forward.1} parent=0 // pred_region
    _
  $region9: #{basic_block_forward.1} parent=0 // pred_fallthru
    _
  // Predicated region
  $region10: #{basic_block_forward.1} parent=0 // pred_check
    _
  $region11: #{basic_block_forward.1} parent=0 // pred_check_branch
    %14 = sbr.rel (0) target = $region13
  $region12: #{basic_block_forward.1} parent=0 // pred_region
    _
  $region13: #{basic_block_forward.1} parent=0 // pred_fallthru
    _
  // Predicated region
  $region14: #{basic_block_forward.1} parent=0 // pred_check
    _
  $region15: #{basic_block_forward.1} parent=0 // pred_check_branch
    %16 = sbr.rel (0) target = $region17
  $region16: #{basic_block_forward.1} parent=0 // pred_region
    _
  $region17: #{basic_block_forward.1} parent=0 // pred_fallthru
    _
  %v17 = vlaneseq
  %v18 = vshrl.u32 %v17, 7
  %v19 = vadd.s32 %v18, 8
  %v20 = vadd.s32 %v18, 16
  %v21 = vadd.s32 %v18, 24
  %v22 = vadd.s32 %v18, 32
  %v23 = vadd.s32 %v18, 40
  %v24 = vadd.s32 %v18, 48
  %v25 = vadd.s32 %v18, 56
  %v26 = vadd.s32 %v18, 64
  %v27 = vadd.s32 %v18, 72
  %v28 = vadd.s32 %v18, 80
  %v29 = vadd.s32 %v18, 88
  %v30 = vadd.s32 %v18, 96
  %v31 = vadd.s32 %v18, 104
  %v32 = vadd.s32 %v18, 112
  %v33 = vadd.s32 %v18, 120
  %vm34 = vcmp.lt.s32.totalorder %v18, 0
  %vm35 = vcmp.lt.s32.totalorder %v19, 0
  %vm36 = vcmp.lt.s32.totalorder %v20, 0
  %vm37 = vcmp.lt.s32.totalorder %v21, 0
  %vm38 = vcmp.lt.s32.totalorder %v22, 0
  %vm39 = vcmp.lt.s32.totalorder %v23, 0
  %vm40 = vcmp.lt.s32.totalorder %v24, 0
  %vm41 = vcmp.lt.s32.totalorder %v25, 0
  %vm42 = vcmp.lt.s32.totalorder %v26, 0
  %vm43 = vcmp.lt.s32.totalorder %v27, 0
  %vm44 = vcmp.lt.s32.totalorder %v28, 0
  %vm45 = vcmp.lt.s32.totalorder %v29, 0
  %vm46 = vcmp.lt.s32.totalorder %v30, 0
  %vm47 = vcmp.lt.s32.totalorder %v31, 0
  %vm48 = vcmp.lt.s32.totalorder %v32, 0
  %vm49 = vcmp.lt.s32.totalorder %v33, 0
  %vm50 = vcmp.ge.s32.totalorder %v20, 0
  %vm51 = vcmp.ge.s32.totalorder %v21, 0
  %vm52 = vcmp.ge.s32.totalorder %v22, 0
  %vm53 = vcmp.ge.s32.totalorder %v23, 0
  %vm54 = vcmp.ge.s32.totalorder %v24, 0
  %vm55 = vcmp.ge.s32.totalorder %v25, 0
  %vm56 = vcmp.ge.s32.totalorder %v26, 0
  %vm57 = vcmp.ge.s32.totalorder %v27, 0
  %vm58 = vcmp.ge.s32.totalorder %v28, 0
  %vm59 = vcmp.ge.s32.totalorder %v29, 0
  %vm60 = vcmp.ge.s32.totalorder %v30, 0
  %vm61 = vcmp.ge.s32.totalorder %v31, 0
  %vm62 = vcmp.ge.s32.totalorder %v32, 0
  %vm63 = vcmp.ge.s32.totalorder %v33, 0
  %vm64 = vcmp.lt.s32.totalorder %v20, 16
  %vm65 = vcmp.lt.s32.totalorder %v21, 16
  %vm66 = vcmp.lt.s32.totalorder %v22, 16
  %vm67 = vcmp.lt.s32.totalorder %v23, 16
  %vm68 = vcmp.lt.s32.totalorder %v24, 16
  %vm69 = vcmp.lt.s32.totalorder %v25, 16
  %vm70 = vcmp.lt.s32.totalorder %v26, 16
  %vm71 = vcmp.lt.s32.totalorder %v27, 16
  %vm72 = vcmp.lt.s32.totalorder %v28, 16
  %vm73 = vcmp.lt.s32.totalorder %v29, 16
  %vm74 = vcmp.lt.s32.totalorder %v30, 16
  %vm75 = vcmp.lt.s32.totalorder %v31, 16
  %vm76 = vcmp.lt.s32.totalorder %v32, 16
  %vm77 = vcmp.lt.s32.totalorder %v33, 16
  %vm78 = vmand %vm50, %vm64
  %vm79 = vmand %vm51, %vm65
  %vm80 = vmand %vm52, %vm66
  %vm81 = vmand %vm53, %vm67
  %vm82 = vmand %vm54, %vm68
  %vm83 = vmand %vm55, %vm69
  %vm84 = vmand %vm56, %vm70
  %vm85 = vmand %vm57, %vm71
  %vm86 = vmand %vm58, %vm72
  %vm87 = vmand %vm59, %vm73
  %vm88 = vmand %vm60, %vm74
  %vm89 = vmand %vm61, %vm75
  %vm90 = vmand %vm62, %vm76
  %vm91 = vmand %vm63, %vm77
  %vm92 = vmor %vm36, %vm78
  %vm93 = vmor %vm37, %vm79
  %vm94 = vmor %vm38, %vm80
  %vm95 = vmor %vm39, %vm81
  %vm96 = vmor %vm40, %vm82
  %vm97 = vmor %vm41, %vm83
  %vm98 = vmor %vm42, %vm84
  %vm99 = vmor %vm43, %vm85
  %vm100 = vmor %vm44, %vm86
  %vm101 = vmor %vm45, %vm87
  %vm102 = vmor %vm46, %vm88
  %vm103 = vmor %vm47, %vm89
  %vm104 = vmor %vm48, %vm90
  %vm105 = vmor %vm49, %vm91
  %vm106 = vcmp.eq.s32.totalorder %v18, 0
  %vm107 = vcmp.eq.s32.totalorder %v19, 0
  %vm108 = vcmp.eq.s32.totalorder %v20, 0
  %vm109 = vcmp.eq.s32.totalorder %v21, 0
  %vm110 = vcmp.eq.s32.totalorder %v22, 0
  %vm111 = vcmp.eq.s32.totalorder %v23, 0
  %vm112 = vcmp.eq.s32.totalorder %v24, 0
  %vm113 = vcmp.eq.s32.totalorder %v25, 0
  %vm114 = vcmp.eq.s32.totalorder %v26, 0
  %vm115 = vcmp.eq.s32.totalorder %v27, 0
  %vm116 = vcmp.eq.s32.totalorder %v28, 0
  %vm117 = vcmp.eq.s32.totalorder %v29, 0
  %vm118 = vcmp.eq.s32.totalorder %v30, 0
  %vm119 = vcmp.eq.s32.totalorder %v31, 0
  %vm120 = vcmp.eq.s32.totalorder %v32, 0
  %vm121 = vcmp.eq.s32.totalorder %v33, 0
  %vm122 = vmor %vm34, %vm106
  %vm123 = vmor %vm35, %vm107
  %vm124 = vmor %vm36, %vm108
  %vm125 = vmor %vm37, %vm109
  %vm126 = vmor %vm38, %vm110
  %vm127 = vmor %vm39, %vm111
  %vm128 = vmor %vm40, %vm112
  %vm129 = vmor %vm41, %vm113
  %vm130 = vmor %vm42, %vm114
  %vm131 = vmor %vm43, %vm115
  %vm132 = vmor %vm44, %vm116
  %vm133 = vmor %vm45, %vm117
  %vm134 = vmor %vm46, %vm118
  %vm135 = vmor %vm47, %vm119
  %vm136 = vmor %vm48, %vm120
  %vm137 = vmor %vm49, %vm121
  %vm138 = vcmp.eq.s32.totalorder %v18, 15
  %vm139 = vcmp.eq.s32.totalorder %v19, 15
  %vm140 = vcmp.eq.s32.totalorder %v20, 15
  %vm141 = vcmp.eq.s32.totalorder %v21, 15
  %vm142 = vcmp.eq.s32.totalorder %v22, 15
  %vm143 = vcmp.eq.s32.totalorder %v23, 15
  %vm144 = vcmp.eq.s32.totalorder %v24, 15
  %vm145 = vcmp.eq.s32.totalorder %v25, 15
  %vm146 = vcmp.eq.s32.totalorder %v26, 15
  %vm147 = vcmp.eq.s32.totalorder %v27, 15
  %vm148 = vcmp.eq.s32.totalorder %v28, 15
  %vm149 = vcmp.eq.s32.totalorder %v29, 15
  %vm150 = vcmp.eq.s32.totalorder %v30, 15
  %vm151 = vcmp.eq.s32.totalorder %v31, 15
  %vm152 = vcmp.eq.s32.totalorder %v32, 15
  %vm153 = vcmp.eq.s32.totalorder %v33, 15
  %vm154 = vmor %vm34, %vm138
  %vm155 = vmor %vm35, %vm139
  %vm156 = vmor %vm36, %vm140
  %vm157 = vmor %vm37, %vm141
  %vm158 = vmor %vm38, %vm142
  %vm159 = vmor %vm39, %vm143
  %vm160 = vmor %vm40, %vm144
  %vm161 = vmor %vm41, %vm145
  %vm162 = vmor %vm42, %vm146
  %vm163 = vmor %vm43, %vm147
  %vm164 = vmor %vm44, %vm148
  %vm165 = vmor %vm45, %vm149
  %vm166 = vmor %vm46, %vm150
  %vm167 = vmor %vm47, %vm151
  %vm168 = vmor %vm48, %vm152
  %vm169 = vmor %vm49, %vm153
  %vm170 = vcmp.eq.s32.totalorder %v18, 16
  %vm171 = vcmp.eq.s32.totalorder %v19, 16
  %vm172 = vcmp.eq.s32.totalorder %v20, 16
  %vm173 = vcmp.eq.s32.totalorder %v21, 16
  %vm174 = vcmp.eq.s32.totalorder %v22, 16
  %vm175 = vcmp.eq.s32.totalorder %v23, 16
  %vm176 = vcmp.eq.s32.totalorder %v24, 16
  %vm177 = vcmp.eq.s32.totalorder %v25, 16
  %vm178 = vcmp.eq.s32.totalorder %v26, 16
  %vm179 = vcmp.eq.s32.totalorder %v27, 16
  %vm180 = vcmp.eq.s32.totalorder %v28, 16
  %vm181 = vcmp.eq.s32.totalorder %v29, 16
  %vm182 = vcmp.eq.s32.totalorder %v30, 16
  %vm183 = vcmp.eq.s32.totalorder %v31, 16
  %vm184 = vcmp.eq.s32.totalorder %v32, 16
  %vm185 = vcmp.eq.s32.totalorder %v33, 16
  %vm186 = vmor %vm122, %vm170
  %vm187 = vmor %vm123, %vm171
  %vm188 = vmor %vm124, %vm172
  %vm189 = vmor %vm125, %vm173
  %vm190 = vmor %vm126, %vm174
  %vm191 = vmor %vm127, %vm175
  %vm192 = vmor %vm128, %vm176
  %vm193 = vmor %vm129, %vm177
  %vm194 = vmor %vm130, %vm178
  %vm195 = vmor %vm131, %vm179
  %vm196 = vmor %vm132, %vm180
  %vm197 = vmor %vm133, %vm181
  %vm198 = vmor %vm134, %vm182
  %vm199 = vmor %vm135, %vm183
  %vm200 = vmor %vm136, %vm184
  %vm201 = vmor %vm137, %vm185
  %vm202 = vcmp.eq.s32.totalorder %v18, 31
  %vm203 = vcmp.eq.s32.totalorder %v19, 31
  %vm204 = vcmp.eq.s32.totalorder %v20, 31
  %vm205 = vcmp.eq.s32.totalorder %v21, 31
  %vm206 = vcmp.eq.s32.totalorder %v22, 31
  %vm207 = vcmp.eq.s32.totalorder %v23, 31
  %vm208 = vcmp.eq.s32.totalorder %v24, 31
  %vm209 = vcmp.eq.s32.totalorder %v25, 31
  %vm210 = vcmp.eq.s32.totalorder %v26, 31
  %vm211 = vcmp.eq.s32.totalorder %v27, 31
  %vm212 = vcmp.eq.s32.totalorder %v28, 31
  %vm213 = vcmp.eq.s32.totalorder %v29, 31
  %vm214 = vcmp.eq.s32.totalorder %v30, 31
  %vm215 = vcmp.eq.s32.totalorder %v31, 31
  %vm216 = vcmp.eq.s32.totalorder %v32, 31
  %vm217 = vcmp.eq.s32.totalorder %v33, 31
  %vm218 = vmor %vm154, %vm202
  %vm219 = vmor %vm155, %vm203
  %vm220 = vmor %vm156, %vm204
  %vm221 = vmor %vm157, %vm205
  %vm222 = vmor %vm158, %vm206
  %vm223 = vmor %vm159, %vm207
  %vm224 = vmor %vm160, %vm208
  %vm225 = vmor %vm161, %vm209
  %vm226 = vmor %vm162, %vm210
  %vm227 = vmor %vm163, %vm211
  %vm228 = vmor %vm164, %vm212
  %vm229 = vmor %vm165, %vm213
  %vm230 = vmor %vm166, %vm214
  %vm231 = vmor %vm167, %vm215
  %vm232 = vmor %vm168, %vm216
  %vm233 = vmor %vm169, %vm217
  %vm234 = vcmp.eq.s32.totalorder %v18, 32
  %vm235 = vcmp.eq.s32.totalorder %v19, 32
  %vm236 = vcmp.eq.s32.totalorder %v20, 32
  %vm237 = vcmp.eq.s32.totalorder %v21, 32
  %vm238 = vcmp.eq.s32.totalorder %v22, 32
  %vm239 = vcmp.eq.s32.totalorder %v23, 32
  %vm240 = vcmp.eq.s32.totalorder %v24, 32
  %vm241 = vcmp.eq.s32.totalorder %v25, 32
  %vm242 = vcmp.eq.s32.totalorder %v26, 32
  %vm243 = vcmp.eq.s32.totalorder %v27, 32
  %vm244 = vcmp.eq.s32.totalorder %v28, 32
  %vm245 = vcmp.eq.s32.totalorder %v29, 32
  %vm246 = vcmp.eq.s32.totalorder %v30, 32
  %vm247 = vcmp.eq.s32.totalorder %v31, 32
  %vm248 = vcmp.eq.s32.totalorder %v32, 32
  %vm249 = vcmp.eq.s32.totalorder %v33, 32
  %vm250 = vmor %vm186, %vm234
  %vm251 = vmor %vm187, %vm235
  %vm252 = vmor %vm188, %vm236
  %vm253 = vmor %vm189, %vm237
  %vm254 = vmor %vm190, %vm238
  %vm255 = vmor %vm191, %vm239
  %vm256 = vmor %vm192, %vm240
  %vm257 = vmor %vm193, %vm241
  %vm258 = vmor %vm194, %vm242
  %vm259 = vmor %vm195, %vm243
  %vm260 = vmor %vm196, %vm244
  %vm261 = vmor %vm197, %vm245
  %vm262 = vmor %vm198, %vm246
  %vm263 = vmor %vm199, %vm247
  %vm264 = vmor %vm200, %vm248
  %vm265 = vmor %vm201, %vm249
  %vm266 = vcmp.eq.s32.totalorder %v18, 47
  %vm267 = vcmp.eq.s32.totalorder %v19, 47
  %vm268 = vcmp.eq.s32.totalorder %v20, 47
  %vm269 = vcmp.eq.s32.totalorder %v21, 47
  %vm270 = vcmp.eq.s32.totalorder %v22, 47
  %vm271 = vcmp.eq.s32.totalorder %v23, 47
  %vm272 = vcmp.eq.s32.totalorder %v24, 47
  %vm273 = vcmp.eq.s32.totalorder %v25, 47
  %vm274 = vcmp.eq.s32.totalorder %v26, 47
  %vm275 = vcmp.eq.s32.totalorder %v27, 47
  %vm276 = vcmp.eq.s32.totalorder %v28, 47
  %vm277 = vcmp.eq.s32.totalorder %v29, 47
  %vm278 = vcmp.eq.s32.totalorder %v30, 47
  %vm279 = vcmp.eq.s32.totalorder %v31, 47
  %vm280 = vcmp.eq.s32.totalorder %v32, 47
  %vm281 = vcmp.eq.s32.totalorder %v33, 47
  %vm282 = vmor %vm218, %vm266
  %vm283 = vmor %vm219, %vm267
  %vm284 = vmor %vm220, %vm268
  %vm285 = vmor %vm221, %vm269
  %vm286 = vmor %vm222, %vm270
  %vm287 = vmor %vm223, %vm271
  %vm288 = vmor %vm224, %vm272
  %vm289 = vmor %vm225, %vm273
  %vm290 = vmor %vm226, %vm274
  %vm291 = vmor %vm227, %vm275
  %vm292 = vmor %vm228, %vm276
  %vm293 = vmor %vm229, %vm277
  %vm294 = vmor %vm230, %vm278
  %vm295 = vmor %vm231, %vm279
  %vm296 = vmor %vm232, %vm280
  %vm297 = vmor %vm233, %vm281
  %vm298 = vcmp.ge.s32.totalorder %v18, 48
  %vm299 = vcmp.ge.s32.totalorder %v19, 48
  %vm300 = vcmp.ge.s32.totalorder %v20, 48
  %vm301 = vcmp.ge.s32.totalorder %v21, 48
  %vm302 = vcmp.ge.s32.totalorder %v22, 48
  %vm303 = vcmp.ge.s32.totalorder %v23, 48
  %vm304 = vcmp.ge.s32.totalorder %v24, 48
  %vm305 = vcmp.ge.s32.totalorder %v25, 48
  %vm306 = vcmp.ge.s32.totalorder %v26, 48
  %vm307 = vcmp.ge.s32.totalorder %v27, 48
  %vm308 = vcmp.ge.s32.totalorder %v28, 48
  %vm309 = vcmp.ge.s32.totalorder %v29, 48
  %vm310 = vcmp.ge.s32.totalorder %v30, 48
  %vm311 = vcmp.ge.s32.totalorder %v31, 48
  %vm312 = vcmp.lt.s32.totalorder %v18, 64
  %vm313 = vcmp.lt.s32.totalorder %v19, 64
  %vm314 = vcmp.lt.s32.totalorder %v20, 64
  %vm315 = vcmp.lt.s32.totalorder %v21, 64
  %vm316 = vcmp.lt.s32.totalorder %v22, 64
  %vm317 = vcmp.lt.s32.totalorder %v23, 64
  %vm318 = vcmp.lt.s32.totalorder %v24, 64
  %vm319 = vcmp.lt.s32.totalorder %v25, 64
  %vm320 = vcmp.lt.s32.totalorder %v26, 64
  %vm321 = vcmp.lt.s32.totalorder %v27, 64
  %vm322 = vcmp.lt.s32.totalorder %v28, 64
  %vm323 = vcmp.lt.s32.totalorder %v29, 64
  %vm324 = vcmp.lt.s32.totalorder %v30, 64
  %vm325 = vcmp.lt.s32.totalorder %v31, 64
  %vm326 = vmand %vm298, %vm312
  %vm327 = vmand %vm299, %vm313
  %vm328 = vmand %vm300, %vm314
  %vm329 = vmand %vm301, %vm315
  %vm330 = vmand %vm302, %vm316
  %vm331 = vmand %vm303, %vm317
  %vm332 = vmand %vm304, %vm318
  %vm333 = vmand %vm305, %vm319
  %vm334 = vmand %vm306, %vm320
  %vm335 = vmand %vm307, %vm321
  %vm336 = vmand %vm308, %vm322
  %vm337 = vmand %vm309, %vm323
  %vm338 = vmand %vm310, %vm324
  %vm339 = vmand %vm311, %vm325
  %vm340 = vmor %vm34, %vm326
  %vm341 = vmor %vm35, %vm327
  %vm342 = vmor %vm36, %vm328
  %vm343 = vmor %vm37, %vm329
  %vm344 = vmor %vm38, %vm330
  %vm345 = vmor %vm39, %vm331
  %vm346 = vmor %vm40, %vm332
  %vm347 = vmor %vm41, %vm333
  %vm348 = vmor %vm42, %vm334
  %vm349 = vmor %vm43, %vm335
  %vm350 = vmor %vm44, %vm336
  %vm351 = vmor %vm45, %vm337
  %vm352 = vmor %vm46, %vm338
  %vm353 = vmor %vm47, %vm339
  %vm354 = vcmp.eq.s32.totalorder %v18, 48
  %vm355 = vcmp.eq.s32.totalorder %v19, 48
  %vm356 = vcmp.eq.s32.totalorder %v20, 48
  %vm357 = vcmp.eq.s32.totalorder %v21, 48
  %vm358 = vcmp.eq.s32.totalorder %v22, 48
  %vm359 = vcmp.eq.s32.totalorder %v23, 48
  %vm360 = vcmp.eq.s32.totalorder %v24, 48
  %vm361 = vcmp.eq.s32.totalorder %v25, 48
  %vm362 = vcmp.eq.s32.totalorder %v26, 48
  %vm363 = vcmp.eq.s32.totalorder %v27, 48
  %vm364 = vcmp.eq.s32.totalorder %v28, 48
  %vm365 = vcmp.eq.s32.totalorder %v29, 48
  %vm366 = vcmp.eq.s32.totalorder %v30, 48
  %vm367 = vcmp.eq.s32.totalorder %v31, 48
  %vm368 = vcmp.eq.s32.totalorder %v32, 48
  %vm369 = vcmp.eq.s32.totalorder %v33, 48
  %vm370 = vmor %vm250, %vm354
  %vm371 = vmor %vm251, %vm355
  %vm372 = vmor %vm252, %vm356
  %vm373 = vmor %vm253, %vm357
  %vm374 = vmor %vm254, %vm358
  %vm375 = vmor %vm255, %vm359
  %vm376 = vmor %vm256, %vm360
  %vm377 = vmor %vm257, %vm361
  %vm378 = vmor %vm258, %vm362
  %vm379 = vmor %vm259, %vm363
  %vm380 = vmor %vm260, %vm364
  %vm381 = vmor %vm261, %vm365
  %vm382 = vmor %vm262, %vm366
  %vm383 = vmor %vm263, %vm367
  %vm384 = vmor %vm264, %vm368
  %vm385 = vmor %vm265, %vm369
  %vm386 = vcmp.eq.s32.totalorder %v18, 63
  %vm387 = vcmp.eq.s32.totalorder %v19, 63
  %vm388 = vcmp.eq.s32.totalorder %v20, 63
  %vm389 = vcmp.eq.s32.totalorder %v21, 63
  %vm390 = vcmp.eq.s32.totalorder %v22, 63
  %vm391 = vcmp.eq.s32.totalorder %v23, 63
  %vm392 = vcmp.eq.s32.totalorder %v24, 63
  %vm393 = vcmp.eq.s32.totalorder %v25, 63
  %vm394 = vcmp.eq.s32.totalorder %v26, 63
  %vm395 = vcmp.eq.s32.totalorder %v27, 63
  %vm396 = vcmp.eq.s32.totalorder %v28, 63
  %vm397 = vcmp.eq.s32.totalorder %v29, 63
  %vm398 = vcmp.eq.s32.totalorder %v30, 63
  %vm399 = vcmp.eq.s32.totalorder %v31, 63
  %vm400 = vcmp.eq.s32.totalorder %v32, 63
  %vm401 = vcmp.eq.s32.totalorder %v33, 63
  %vm402 = vmor %vm282, %vm386
  %vm403 = vmor %vm283, %vm387
  %vm404 = vmor %vm284, %vm388
  %vm405 = vmor %vm285, %vm389
  %vm406 = vmor %vm286, %vm390
  %vm407 = vmor %vm287, %vm391
  %vm408 = vmor %vm288, %vm392
  %vm409 = vmor %vm289, %vm393
  %vm410 = vmor %vm290, %vm394
  %vm411 = vmor %vm291, %vm395
  %vm412 = vmor %vm292, %vm396
  %vm413 = vmor %vm293, %vm397
  %vm414 = vmor %vm294, %vm398
  %vm415 = vmor %vm295, %vm399
  %vm416 = vmor %vm296, %vm400
  %vm417 = vmor %vm297, %vm401
  %vm418 = vcmp.ge.s32.totalorder %v20, 64
  %vm419 = vcmp.ge.s32.totalorder %v21, 64
  %vm420 = vcmp.ge.s32.totalorder %v22, 64
  %vm421 = vcmp.ge.s32.totalorder %v23, 64
  %vm422 = vcmp.ge.s32.totalorder %v24, 64
  %vm423 = vcmp.ge.s32.totalorder %v25, 64
  %vm424 = vcmp.ge.s32.totalorder %v26, 64
  %vm425 = vcmp.ge.s32.totalorder %v27, 64
  %vm426 = vcmp.ge.s32.totalorder %v28, 64
  %vm427 = vcmp.ge.s32.totalorder %v29, 64
  %vm428 = vcmp.ge.s32.totalorder %v30, 64
  %vm429 = vcmp.ge.s32.totalorder %v31, 64
  %vm430 = vcmp.ge.s32.totalorder %v32, 64
  %vm431 = vcmp.ge.s32.totalorder %v33, 64
  %vm432 = vcmp.lt.s32.totalorder %v20, 80
  %vm433 = vcmp.lt.s32.totalorder %v21, 80
  %vm434 = vcmp.lt.s32.totalorder %v22, 80
  %vm435 = vcmp.lt.s32.totalorder %v23, 80
  %vm436 = vcmp.lt.s32.totalorder %v24, 80
  %vm437 = vcmp.lt.s32.totalorder %v25, 80
  %vm438 = vcmp.lt.s32.totalorder %v26, 80
  %vm439 = vcmp.lt.s32.totalorder %v27, 80
  %vm440 = vcmp.lt.s32.totalorder %v28, 80
  %vm441 = vcmp.lt.s32.totalorder %v29, 80
  %vm442 = vcmp.lt.s32.totalorder %v30, 80
  %vm443 = vcmp.lt.s32.totalorder %v31, 80
  %vm444 = vcmp.lt.s32.totalorder %v32, 80
  %vm445 = vcmp.lt.s32.totalorder %v33, 80
  %vm446 = vmand %vm418, %vm432
  %vm447 = vmand %vm419, %vm433
  %vm448 = vmand %vm420, %vm434
  %vm449 = vmand %vm421, %vm435
  %vm450 = vmand %vm422, %vm436
  %vm451 = vmand %vm423, %vm437
  %vm452 = vmand %vm424, %vm438
  %vm453 = vmand %vm425, %vm439
  %vm454 = vmand %vm426, %vm440
  %vm455 = vmand %vm427, %vm441
  %vm456 = vmand %vm428, %vm442
  %vm457 = vmand %vm429, %vm443
  %vm458 = vmand %vm430, %vm444
  %vm459 = vmand %vm431, %vm445
  %vm460 = vmor %vm92, %vm446
  %vm461 = vmor %vm93, %vm447
  %vm462 = vmor %vm94, %vm448
  %vm463 = vmor %vm95, %vm449
  %vm464 = vmor %vm96, %vm450
  %vm465 = vmor %vm97, %vm451
  %vm466 = vmor %vm98, %vm452
  %vm467 = vmor %vm99, %vm453
  %vm468 = vmor %vm100, %vm454
  %vm469 = vmor %vm101, %vm455
  %vm470 = vmor %vm102, %vm456
  %vm471 = vmor %vm103, %vm457
  %vm472 = vmor %vm104, %vm458
  %vm473 = vmor %vm105, %vm459
  %vm474 = vcmp.eq.s32.totalorder %v18, 64
  %vm475 = vcmp.eq.s32.totalorder %v19, 64
  %vm476 = vcmp.eq.s32.totalorder %v20, 64
  %vm477 = vcmp.eq.s32.totalorder %v21, 64
  %vm478 = vcmp.eq.s32.totalorder %v22, 64
  %vm479 = vcmp.eq.s32.totalorder %v23, 64
  %vm480 = vcmp.eq.s32.totalorder %v24, 64
  %vm481 = vcmp.eq.s32.totalorder %v25, 64
  %vm482 = vcmp.eq.s32.totalorder %v26, 64
  %vm483 = vcmp.eq.s32.totalorder %v27, 64
  %vm484 = vcmp.eq.s32.totalorder %v28, 64
  %vm485 = vcmp.eq.s32.totalorder %v29, 64
  %vm486 = vcmp.eq.s32.totalorder %v30, 64
  %vm487 = vcmp.eq.s32.totalorder %v31, 64
  %vm488 = vcmp.eq.s32.totalorder %v32, 64
  %vm489 = vcmp.eq.s32.totalorder %v33, 64
  %vm490 = vmor %vm370, %vm474
  %vm491 = vmor %vm371, %vm475
  %vm492 = vmor %vm372, %vm476
  %vm493 = vmor %vm373, %vm477
  %vm494 = vmor %vm374, %vm478
  %vm495 = vmor %vm375, %vm479
  %vm496 = vmor %vm376, %vm480
  %vm497 = vmor %vm377, %vm481
  %vm498 = vmor %vm378, %vm482
  %vm499 = vmor %vm379, %vm483
  %vm500 = vmor %vm380, %vm484
  %vm501 = vmor %vm381, %vm485
  %vm502 = vmor %vm382, %vm486
  %vm503 = vmor %vm383, %vm487
  %vm504 = vmor %vm384, %vm488
  %vm505 = vmor %vm385, %vm489
  %vm506 = vcmp.eq.s32.totalorder %v18, 79
  %vm507 = vcmp.eq.s32.totalorder %v19, 79
  %vm508 = vcmp.eq.s32.totalorder %v20, 79
  %vm509 = vcmp.eq.s32.totalorder %v21, 79
  %vm510 = vcmp.eq.s32.totalorder %v22, 79
  %vm511 = vcmp.eq.s32.totalorder %v23, 79
  %vm512 = vcmp.eq.s32.totalorder %v24, 79
  %vm513 = vcmp.eq.s32.totalorder %v25, 79
  %vm514 = vcmp.eq.s32.totalorder %v26, 79
  %vm515 = vcmp.eq.s32.totalorder %v27, 79
  %vm516 = vcmp.eq.s32.totalorder %v28, 79
  %vm517 = vcmp.eq.s32.totalorder %v29, 79
  %vm518 = vcmp.eq.s32.totalorder %v30, 79
  %vm519 = vcmp.eq.s32.totalorder %v31, 79
  %vm520 = vcmp.eq.s32.totalorder %v32, 79
  %vm521 = vcmp.eq.s32.totalorder %v33, 79
  %vm522 = vmor %vm402, %vm506
  %vm523 = vmor %vm403, %vm507
  %vm524 = vmor %vm404, %vm508
  %vm525 = vmor %vm405, %vm509
  %vm526 = vmor %vm406, %vm510
  %vm527 = vmor %vm407, %vm511
  %vm528 = vmor %vm408, %vm512
  %vm529 = vmor %vm409, %vm513
  %vm530 = vmor %vm410, %vm514
  %vm531 = vmor %vm411, %vm515
  %vm532 = vmor %vm412, %vm516
  %vm533 = vmor %vm413, %vm517
  %vm534 = vmor %vm414, %vm518
  %vm535 = vmor %vm415, %vm519
  %vm536 = vmor %vm416, %vm520
  %vm537 = vmor %vm417, %vm521
  %vm538 = vcmp.eq.s32.totalorder %v18, 80
  %vm539 = vcmp.eq.s32.totalorder %v19, 80
  %vm540 = vcmp.eq.s32.totalorder %v20, 80
  %vm541 = vcmp.eq.s32.totalorder %v21, 80
  %vm542 = vcmp.eq.s32.totalorder %v22, 80
  %vm543 = vcmp.eq.s32.totalorder %v23, 80
  %vm544 = vcmp.eq.s32.totalorder %v24, 80
  %vm545 = vcmp.eq.s32.totalorder %v25, 80
  %vm546 = vcmp.eq.s32.totalorder %v26, 80
  %vm547 = vcmp.eq.s32.totalorder %v27, 80
  %vm548 = vcmp.eq.s32.totalorder %v28, 80
  %vm549 = vcmp.eq.s32.totalorder %v29, 80
  %vm550 = vcmp.eq.s32.totalorder %v30, 80
  %vm551 = vcmp.eq.s32.totalorder %v31, 80
  %vm552 = vcmp.eq.s32.totalorder %v32, 80
  %vm553 = vcmp.eq.s32.totalorder %v33, 80
  %vm554 = vmor %vm490, %vm538
  %vm555 = vmor %vm491, %vm539
  %vm556 = vmor %vm492, %vm540
  %vm557 = vmor %vm493, %vm541
  %vm558 = vmor %vm494, %vm542
  %vm559 = vmor %vm495, %vm543
  %vm560 = vmor %vm496, %vm544
  %vm561 = vmor %vm497, %vm545
  %vm562 = vmor %vm498, %vm546
  %vm563 = vmor %vm499, %vm547
  %vm564 = vmor %vm500, %vm548
  %vm565 = vmor %vm501, %vm549
  %vm566 = vmor %vm502, %vm550
  %vm567 = vmor %vm503, %vm551
  %vm568 = vmor %vm504, %vm552
  %vm569 = vmor %vm505, %vm553
  %vm570 = vcmp.eq.s32.totalorder %v18, 95
  %vm571 = vcmp.eq.s32.totalorder %v19, 95
  %vm572 = vcmp.eq.s32.totalorder %v20, 95
  %vm573 = vcmp.eq.s32.totalorder %v21, 95
  %vm574 = vcmp.eq.s32.totalorder %v22, 95
  %vm575 = vcmp.eq.s32.totalorder %v23, 95
  %vm576 = vcmp.eq.s32.totalorder %v24, 95
  %vm577 = vcmp.eq.s32.totalorder %v25, 95
  %vm578 = vcmp.eq.s32.totalorder %v26, 95
  %vm579 = vcmp.eq.s32.totalorder %v27, 95
  %vm580 = vcmp.eq.s32.totalorder %v28, 95
  %vm581 = vcmp.eq.s32.totalorder %v29, 95
  %vm582 = vcmp.eq.s32.totalorder %v30, 95
  %vm583 = vcmp.eq.s32.totalorder %v31, 95
  %vm584 = vcmp.eq.s32.totalorder %v32, 95
  %vm585 = vcmp.eq.s32.totalorder %v33, 95
  %vm586 = vmor %vm522, %vm570
  %vm587 = vmor %vm523, %vm571
  %vm588 = vmor %vm524, %vm572
  %vm589 = vmor %vm525, %vm573
  %vm590 = vmor %vm526, %vm574
  %vm591 = vmor %vm527, %vm575
  %vm592 = vmor %vm528, %vm576
  %vm593 = vmor %vm529, %vm577
  %vm594 = vmor %vm530, %vm578
  %vm595 = vmor %vm531, %vm579
  %vm596 = vmor %vm532, %vm580
  %vm597 = vmor %vm533, %vm581
  %vm598 = vmor %vm534, %vm582
  %vm599 = vmor %vm535, %vm583
  %vm600 = vmor %vm536, %vm584
  %vm601 = vmor %vm537, %vm585
  %vm602 = vcmp.eq.s32.totalorder %v18, 96
  %vm603 = vcmp.eq.s32.totalorder %v19, 96
  %vm604 = vcmp.eq.s32.totalorder %v20, 96
  %vm605 = vcmp.eq.s32.totalorder %v21, 96
  %vm606 = vcmp.eq.s32.totalorder %v22, 96
  %vm607 = vcmp.eq.s32.totalorder %v23, 96
  %vm608 = vcmp.eq.s32.totalorder %v24, 96
  %vm609 = vcmp.eq.s32.totalorder %v25, 96
  %vm610 = vcmp.eq.s32.totalorder %v26, 96
  %vm611 = vcmp.eq.s32.totalorder %v27, 96
  %vm612 = vcmp.eq.s32.totalorder %v28, 96
  %vm613 = vcmp.eq.s32.totalorder %v29, 96
  %vm614 = vcmp.eq.s32.totalorder %v30, 96
  %vm615 = vcmp.eq.s32.totalorder %v31, 96
  %vm616 = vcmp.eq.s32.totalorder %v32, 96
  %vm617 = vcmp.eq.s32.totalorder %v33, 96
  %vm618 = vmor %vm554, %vm602
  %vm619 = vmor %vm555, %vm603
  %vm620 = vmor %vm556, %vm604
  %vm621 = vmor %vm557, %vm605
  %vm622 = vmor %vm558, %vm606
  %vm623 = vmor %vm559, %vm607
  %vm624 = vmor %vm560, %vm608
  %vm625 = vmor %vm561, %vm609
  %vm626 = vmor %vm562, %vm610
  %vm627 = vmor %vm563, %vm611
  %vm628 = vmor %vm564, %vm612
  %vm629 = vmor %vm565, %vm613
  %vm630 = vmor %vm566, %vm614
  %vm631 = vmor %vm567, %vm615
  %vm632 = vmor %vm568, %vm616
  %vm633 = vmor %vm569, %vm617
  %vm634 = vcmp.eq.s32.totalorder %v18, 111
  %vm635 = vcmp.eq.s32.totalorder %v19, 111
  %vm636 = vcmp.eq.s32.totalorder %v20, 111
  %vm637 = vcmp.eq.s32.totalorder %v21, 111
  %vm638 = vcmp.eq.s32.totalorder %v22, 111
  %vm639 = vcmp.eq.s32.totalorder %v23, 111
  %vm640 = vcmp.eq.s32.totalorder %v24, 111
  %vm641 = vcmp.eq.s32.totalorder %v25, 111
  %vm642 = vcmp.eq.s32.totalorder %v26, 111
  %vm643 = vcmp.eq.s32.totalorder %v27, 111
  %vm644 = vcmp.eq.s32.totalorder %v28, 111
  %vm645 = vcmp.eq.s32.totalorder %v29, 111
  %vm646 = vcmp.eq.s32.totalorder %v30, 111
  %vm647 = vcmp.eq.s32.totalorder %v31, 111
  %vm648 = vcmp.eq.s32.totalorder %v32, 111
  %vm649 = vcmp.eq.s32.totalorder %v33, 111
  %vm650 = vmor %vm586, %vm634
  %vm651 = vmor %vm587, %vm635
  %vm652 = vmor %vm588, %vm636
  %vm653 = vmor %vm589, %vm637
  %vm654 = vmor %vm590, %vm638
  %vm655 = vmor %vm591, %vm639
  %vm656 = vmor %vm592, %vm640
  %vm657 = vmor %vm593, %vm641
  %vm658 = vmor %vm594, %vm642
  %vm659 = vmor %vm595, %vm643
  %vm660 = vmor %vm596, %vm644
  %vm661 = vmor %vm597, %vm645
  %vm662 = vmor %vm598, %vm646
  %vm663 = vmor %vm599, %vm647
  %vm664 = vmor %vm600, %vm648
  %vm665 = vmor %vm601, %vm649
  %vm666 = vcmp.ge.s32.totalorder %v18, 112
  %vm667 = vcmp.ge.s32.totalorder %v19, 112
  %vm668 = vcmp.ge.s32.totalorder %v20, 112
  %vm669 = vcmp.ge.s32.totalorder %v21, 112
  %vm670 = vcmp.ge.s32.totalorder %v22, 112
  %vm671 = vcmp.ge.s32.totalorder %v23, 112
  %vm672 = vcmp.ge.s32.totalorder %v24, 112
  %vm673 = vcmp.ge.s32.totalorder %v25, 112
  %vm674 = vcmp.ge.s32.totalorder %v26, 112
  %vm675 = vcmp.ge.s32.totalorder %v27, 112
  %vm676 = vcmp.ge.s32.totalorder %v28, 112
  %vm677 = vcmp.ge.s32.totalorder %v29, 112
  %vm678 = vcmp.ge.s32.totalorder %v30, 112
  %vm679 = vcmp.ge.s32.totalorder %v31, 112
  %vm680 = vcmp.lt.s32.totalorder %v18, 128
  %vm681 = vcmp.lt.s32.totalorder %v19, 128
  %vm682 = vcmp.lt.s32.totalorder %v20, 128
  %vm683 = vcmp.lt.s32.totalorder %v21, 128
  %vm684 = vcmp.lt.s32.totalorder %v22, 128
  %vm685 = vcmp.lt.s32.totalorder %v23, 128
  %vm686 = vcmp.lt.s32.totalorder %v24, 128
  %vm687 = vcmp.lt.s32.totalorder %v25, 128
  %vm688 = vcmp.lt.s32.totalorder %v26, 128
  %vm689 = vcmp.lt.s32.totalorder %v27, 128
  %vm690 = vcmp.lt.s32.totalorder %v28, 128
  %vm691 = vcmp.lt.s32.totalorder %v29, 128
  %vm692 = vcmp.lt.s32.totalorder %v30, 128
  %vm693 = vcmp.lt.s32.totalorder %v31, 128
  %vm694 = vmand %vm666, %vm680
  %vm695 = vmand %vm667, %vm681
  %vm696 = vmand %vm668, %vm682
  %vm697 = vmand %vm669, %vm683
  %vm698 = vmand %vm670, %vm684
  %vm699 = vmand %vm671, %vm685
  %vm700 = vmand %vm672, %vm686
  %vm701 = vmand %vm673, %vm687
  %vm702 = vmand %vm674, %vm688
  %vm703 = vmand %vm675, %vm689
  %vm704 = vmand %vm676, %vm690
  %vm705 = vmand %vm677, %vm691
  %vm706 = vmand %vm678, %vm692
  %vm707 = vmand %vm679, %vm693
  %vm708 = vmor %vm340, %vm694
  %vm709 = vmor %vm341, %vm695
  %vm710 = vmor %vm342, %vm696
  %vm711 = vmor %vm343, %vm697
  %vm712 = vmor %vm344, %vm698
  %vm713 = vmor %vm345, %vm699
  %vm714 = vmor %vm346, %vm700
  %vm715 = vmor %vm347, %vm701
  %vm716 = vmor %vm348, %vm702
  %vm717 = vmor %vm349, %vm703
  %vm718 = vmor %vm350, %vm704
  %vm719 = vmor %vm351, %vm705
  %vm720 = vmor %vm352, %vm706
  %vm721 = vmor %vm353, %vm707
  %vm722 = vcmp.eq.s32.totalorder %v18, 112
  %vm723 = vcmp.eq.s32.totalorder %v19, 112
  %vm724 = vcmp.eq.s32.totalorder %v20, 112
  %vm725 = vcmp.eq.s32.totalorder %v21, 112
  %vm726 = vcmp.eq.s32.totalorder %v22, 112
  %vm727 = vcmp.eq.s32.totalorder %v23, 112
  %vm728 = vcmp.eq.s32.totalorder %v24, 112
  %vm729 = vcmp.eq.s32.totalorder %v25, 112
  %vm730 = vcmp.eq.s32.totalorder %v26, 112
  %vm731 = vcmp.eq.s32.totalorder %v27, 112
  %vm732 = vcmp.eq.s32.totalorder %v28, 112
  %vm733 = vcmp.eq.s32.totalorder %v29, 112
  %vm734 = vcmp.eq.s32.totalorder %v30, 112
  %vm735 = vcmp.eq.s32.totalorder %v31, 112
  %vm736 = vcmp.eq.s32.totalorder %v32, 112
  %vm737 = vcmp.eq.s32.totalorder %v33, 112
  %vm738 = vmor %vm618, %vm722
  %vm739 = vmor %vm619, %vm723
  %vm740 = vmor %vm620, %vm724
  %vm741 = vmor %vm621, %vm725
  %vm742 = vmor %vm622, %vm726
  %vm743 = vmor %vm623, %vm727
  %vm744 = vmor %vm624, %vm728
  %vm745 = vmor %vm625, %vm729
  %vm746 = vmor %vm626, %vm730
  %vm747 = vmor %vm627, %vm731
  %vm748 = vmor %vm628, %vm732
  %vm749 = vmor %vm629, %vm733
  %vm750 = vmor %vm630, %vm734
  %vm751 = vmor %vm631, %vm735
  %vm752 = vmor %vm632, %vm736
  %vm753 = vmor %vm633, %vm737
  %vm754 = vcmp.eq.s32.totalorder %v18, 127
  %vm755 = vcmp.eq.s32.totalorder %v19, 127
  %vm756 = vcmp.eq.s32.totalorder %v20, 127
  %vm757 = vcmp.eq.s32.totalorder %v21, 127
  %vm758 = vcmp.eq.s32.totalorder %v22, 127
  %vm759 = vcmp.eq.s32.totalorder %v23, 127
  %vm760 = vcmp.eq.s32.totalorder %v24, 127
  %vm761 = vcmp.eq.s32.totalorder %v25, 127
  %vm762 = vcmp.eq.s32.totalorder %v26, 127
  %vm763 = vcmp.eq.s32.totalorder %v27, 127
  %vm764 = vcmp.eq.s32.totalorder %v28, 127
  %vm765 = vcmp.eq.s32.totalorder %v29, 127
  %vm766 = vcmp.eq.s32.totalorder %v30, 127
  %vm767 = vcmp.eq.s32.totalorder %v31, 127
  %vm768 = vcmp.eq.s32.totalorder %v32, 127
  %vm769 = vcmp.eq.s32.totalorder %v33, 127
  %vm770 = vmor %vm650, %vm754
  %vm771 = vmor %vm651, %vm755
  %vm772 = vmor %vm652, %vm756
  %vm773 = vmor %vm653, %vm757
  %vm774 = vmor %vm654, %vm758
  %vm775 = vmor %vm655, %vm759
  %vm776 = vmor %vm656, %vm760
  %vm777 = vmor %vm657, %vm761
  %vm778 = vmor %vm658, %vm762
  %vm779 = vmor %vm659, %vm763
  %vm780 = vmor %vm660, %vm764
  %vm781 = vmor %vm661, %vm765
  %vm782 = vmor %vm662, %vm766
  %vm783 = vmor %vm663, %vm767
  %vm784 = vmor %vm664, %vm768
  %vm785 = vmor %vm665, %vm769
  %v786 = vlaneseq
  %v787 = vand.u32 %v786, 127
  %v788 = vand.u32 %v787, 7
  %vm789 = vcmp.lt.s32.totalorder %v788, 2
  %vm790 = vcmp.ge.s32.totalorder %v788, 2
  %vm791 = vcmp.lt.s32.totalorder %v788, 4
  %vm792 = vmand %vm790, %vm791
  %v793 = vld [vmem:[%s0] sm:$0xf]
  %v794 = vld [vmem:[%s0 + $0x4] sm:$0xf]
  %v795 = vld [vmem:[%s0 + $0x8] sm:$0xf]
  %v796 = vld [vmem:[%s0 + $0xc] sm:$0xf]
  %v797 = vld [vmem:[%s0 + $0x10] sm:$0xf]
  %v798 = vld [vmem:[%s0 + $0x14] sm:$0xf]
  %v799 = vld [vmem:[%s0 + $0x18] sm:$0xf]
  %v800 = vld [vmem:[%s0 + $0x1c] sm:$0xf]
  %v801 = vld [vmem:[%s0 + $0x20] sm:$0xf]
  %v802 = vld [vmem:[%s0 + $0x24] sm:$0xf]
  %v803 = vld [vmem:[%s0 + $0x28] sm:$0xf]
  %v804 = vld [vmem:[%s0 + $0x2c] sm:$0xf]
  %v805 = vld [vmem:[%s0 + $0x30] sm:$0xf]
  %v806 = vld [vmem:[%s0 + $0x34] sm:$0xf]
  %v807 = vld [vmem:[%s0 + $0x38] sm:$0xf]
  %v808 = vld [vmem:[%s0 + $0x3c] sm:$0xf]
  %v809 = vunpack.c.l.bf16 %v793
  %v810 = vunpack.c.l.bf16 %v794
  %v811 = vunpack.c.l.bf16 %v795
  %v812 = vunpack.c.l.bf16 %v796
  %v813 = vunpack.c.l.bf16 %v797
  %v814 = vunpack.c.l.bf16 %v798
  %v815 = vunpack.c.l.bf16 %v799
  %v816 = vunpack.c.l.bf16 %v800
  %v817 = vunpack.c.l.bf16 %v801
  %v818 = vunpack.c.l.bf16 %v802
  %v819 = vunpack.c.l.bf16 %v803
  %v820 = vunpack.c.l.bf16 %v804
  %v821 = vunpack.c.l.bf16 %v805
  %v822 = vunpack.c.l.bf16 %v806
  %v823 = vunpack.c.l.bf16 %v807
  %v824 = vunpack.c.l.bf16 %v808
  %v825 = vsel %vm708, 1, 0
  %v826 = vsel %vm709, 1, 0
  %v827 = vsel %vm710, 1, 0
  %v828 = vsel %vm711, 1, 0
  %v829 = vsel %vm712, 1, 0
  %v830 = vsel %vm713, 1, 0
  %v831 = vsel %vm714, 1, 0
  %v832 = vsel %vm715, 1, 0
  %v833 = vsel %vm716, 1, 0
  %v834 = vsel %vm717, 1, 0
  %v835 = vsel %vm718, 1, 0
  %v836 = vsel %vm719, 1, 0
  %v837 = vsel %vm720, 1, 0
  %v838 = vsel %vm721, 1, 0
  %vm839 = vcmp.eq.s32.totalorder %v825, 1
  %vm840 = vcmp.eq.s32.totalorder %v826, 1
  %vm841 = vcmp.eq.s32.totalorder %v827, 1
  %vm842 = vcmp.eq.s32.totalorder %v828, 1
  %vm843 = vcmp.eq.s32.totalorder %v829, 1
  %vm844 = vcmp.eq.s32.totalorder %v830, 1
  %vm845 = vcmp.eq.s32.totalorder %v831, 1
  %vm846 = vcmp.eq.s32.totalorder %v832, 1
  %vm847 = vcmp.eq.s32.totalorder %v833, 1
  %vm848 = vcmp.eq.s32.totalorder %v834, 1
  %vm849 = vcmp.eq.s32.totalorder %v835, 1
  %vm850 = vcmp.eq.s32.totalorder %v836, 1
  %vm851 = vcmp.eq.s32.totalorder %v837, 1
  %vm852 = vcmp.eq.s32.totalorder %v838, 1
  %v853 = vsel %vm839, 0.0, %v811
  %v854 = vsel %vm840, 0.0, %v812
  %v855 = vsel %vm841, 0.0, %v813
  %v856 = vsel %vm842, 0.0, %v814
  %v857 = vsel %vm843, 0.0, %v815
  %v858 = vsel %vm844, 0.0, %v816
  %v859 = vsel %vm845, 0.0, %v817
  %v860 = vsel %vm846, 0.0, %v818
  %v861 = vsel %vm847, 0.0, %v819
  %v862 = vsel %vm848, 0.0, %v820
  %v863 = vsel %vm849, 0.0, %v821
  %v864 = vsel %vm850, 0.0, %v822
  %v865 = vsel %vm851, 0.0, %v823
  %v866 = vsel %vm852, 0.0, %v824
  %v867 = vsel %vm460, 1, 0
  %v868 = vsel %vm461, 1, 0
  %v869 = vsel %vm462, 1, 0
  %v870 = vsel %vm463, 1, 0
  %v871 = vsel %vm464, 1, 0
  %v872 = vsel %vm465, 1, 0
  %v873 = vsel %vm466, 1, 0
  %v874 = vsel %vm467, 1, 0
  %v875 = vsel %vm468, 1, 0
  %v876 = vsel %vm469, 1, 0
  %v877 = vsel %vm470, 1, 0
  %v878 = vsel %vm471, 1, 0
  %v879 = vsel %vm472, 1, 0
  %v880 = vsel %vm473, 1, 0
  %vm881 = vcmp.eq.s32.totalorder %v867, 1
  %vm882 = vcmp.eq.s32.totalorder %v868, 1
  %vm883 = vcmp.eq.s32.totalorder %v869, 1
  %vm884 = vcmp.eq.s32.totalorder %v870, 1
  %vm885 = vcmp.eq.s32.totalorder %v871, 1
  %vm886 = vcmp.eq.s32.totalorder %v872, 1
  %vm887 = vcmp.eq.s32.totalorder %v873, 1
  %vm888 = vcmp.eq.s32.totalorder %v874, 1
  %vm889 = vcmp.eq.s32.totalorder %v875, 1
  %vm890 = vcmp.eq.s32.totalorder %v876, 1
  %vm891 = vcmp.eq.s32.totalorder %v877, 1
  %vm892 = vcmp.eq.s32.totalorder %v878, 1
  %vm893 = vcmp.eq.s32.totalorder %v879, 1
  %vm894 = vcmp.eq.s32.totalorder %v880, 1
  %v895 = vsel %vm881, 0.0, %v809
  %v896 = vsel %vm882, 0.0, %v810
  %v897 = vsel %vm883, 0.0, %v811
  %v898 = vsel %vm884, 0.0, %v812
  %v899 = vsel %vm885, 0.0, %v813
  %v900 = vsel %vm886, 0.0, %v814
  %v901 = vsel %vm887, 0.0, %v815
  %v902 = vsel %vm888, 0.0, %v816
  %v903 = vsel %vm889, 0.0, %v817
  %v904 = vsel %vm890, 0.0, %v818
  %v905 = vsel %vm891, 0.0, %v819
  %v906 = vsel %vm892, 0.0, %v820
  %v907 = vsel %vm893, 0.0, %v821
  %v908 = vsel %vm894, 0.0, %v822
  %v909 = vsel %vm792, 1, 0
  %vm910 = vcmp.eq.s32.totalorder %v909, 1
  %v911 = vsel %vm910, 0.0, %v809
  %v912 = vsel %vm910, 0.0, %v810
  %v913 = vsel %vm910, %v895, %v811
  %v914 = vsel %vm910, %v896, %v812
  %v915 = vsel %vm910, %v897, %v813
  %v916 = vsel %vm910, %v898, %v814
  %v917 = vsel %vm910, %v899, %v815
  %v918 = vsel %vm910, %v900, %v816
  %v919 = vsel %vm910, %v901, %v817
  %v920 = vsel %vm910, %v902, %v818
  %v921 = vsel %vm910, %v903, %v819
  %v922 = vsel %vm910, %v904, %v820
  %v923 = vsel %vm910, %v905, %v821
  %v924 = vsel %vm910, %v906, %v822
  %v925 = vsel %vm910, %v907, %v823
  %v926 = vsel %vm910, %v908, %v824
  %v927 = vsel %vm789, 1, 0
  %vm928 = vcmp.eq.s32.totalorder %v927, 1
  %v929 = vsel %vm928, %v853, %v911
  %v930 = vsel %vm928, %v854, %v912
  %v931 = vsel %vm928, %v855, %v913
  %v932 = vsel %vm928, %v856, %v914
  %v933 = vsel %vm928, %v857, %v915
  %v934 = vsel %vm928, %v858, %v916
  %v935 = vsel %vm928, %v859, %v917
  %v936 = vsel %vm928, %v860, %v918
  %v937 = vsel %vm928, %v861, %v919
  %v938 = vsel %vm928, %v862, %v920
  %v939 = vsel %vm928, %v863, %v921
  %v940 = vsel %vm928, %v864, %v922
  %v941 = vsel %vm928, %v865, %v923
  %v942 = vsel %vm928, %v866, %v924
  %v943 = vsel %vm928, 0.0, %v925
  %v944 = vsel %vm928, 0.0, %v926
  %v945 = vld [vmem:[%s3] sm:$0x1]
  %v946 = vld [vmem:[%s3 + $0x1] sm:$0x1]
  %v947 = vld [vmem:[%s3 + $0x2] sm:$0x1]
  %v948 = vld [vmem:[%s3 + $0x3] sm:$0x1]
  %v949 = vrot.slane %v929, 7
  %v950 = vrot.slane %v930, 7
  %v951 = vrot.slane %v931, 7
  %v952 = vrot.slane %v932, 7
  %v953 = vrot.slane %v933, 7
  %v954 = vrot.slane %v934, 7
  %v955 = vrot.slane %v935, 7
  %v956 = vrot.slane %v936, 7
  %v957 = vrot.slane %v937, 7
  %v958 = vrot.slane %v938, 7
  %v959 = vrot.slane %v939, 7
  %v960 = vrot.slane %v940, 7
  %v961 = vrot.slane %v941, 7
  %v962 = vrot.slane %v942, 7
  %v963 = vrot.slane %v943, 7
  %v964 = vrot.slane %v944, 7
  %vm965 = vcmp.lt.s32.totalorder %v18, 1
  %v966 = vsel %vm965, %v963, %v964
  %v967 = vsel %vm965, %v962, %v963
  %v968 = vsel %vm965, %v961, %v962
  %v969 = vsel %vm965, %v960, %v961
  %v970 = vsel %vm965, %v959, %v960
  %v971 = vsel %vm965, %v958, %v959
  %v972 = vsel %vm965, %v957, %v958
  %v973 = vsel %vm965, %v956, %v957
  %v974 = vsel %vm965, %v955, %v956
  %v975 = vsel %vm965, %v954, %v955
  %v976 = vsel %vm965, %v953, %v954
  %v977 = vsel %vm965, %v952, %v953
  %v978 = vsel %vm965, %v951, %v952
  %v979 = vsel %vm965, %v950, %v951
  %v980 = vsel %vm965, %v949, %v950
  %v981 = vsel %vm965, %v964, %v949
  %v982 = vsel %vm738, 1, 0
  %v983 = vsel %vm739, 1, 0
  %v984 = vsel %vm740, 1, 0
  %v985 = vsel %vm741, 1, 0
  %v986 = vsel %vm742, 1, 0
  %v987 = vsel %vm743, 1, 0
  %v988 = vsel %vm744, 1, 0
  %v989 = vsel %vm745, 1, 0
  %v990 = vsel %vm746, 1, 0
  %v991 = vsel %vm747, 1, 0
  %v992 = vsel %vm748, 1, 0
  %v993 = vsel %vm749, 1, 0
  %v994 = vsel %vm750, 1, 0
  %v995 = vsel %vm751, 1, 0
  %v996 = vsel %vm752, 1, 0
  %v997 = vsel %vm753, 1, 0
  %vm998 = vcmp.eq.s32.totalorder %v982, 1
  %vm999 = vcmp.eq.s32.totalorder %v983, 1
  %vm1000 = vcmp.eq.s32.totalorder %v984, 1
  %vm1001 = vcmp.eq.s32.totalorder %v985, 1
  %vm1002 = vcmp.eq.s32.totalorder %v986, 1
  %vm1003 = vcmp.eq.s32.totalorder %v987, 1
  %vm1004 = vcmp.eq.s32.totalorder %v988, 1
  %vm1005 = vcmp.eq.s32.totalorder %v989, 1
  %vm1006 = vcmp.eq.s32.totalorder %v990, 1
  %vm1007 = vcmp.eq.s32.totalorder %v991, 1
  %vm1008 = vcmp.eq.s32.totalorder %v992, 1
  %vm1009 = vcmp.eq.s32.totalorder %v993, 1
  %vm1010 = vcmp.eq.s32.totalorder %v994, 1
  %vm1011 = vcmp.eq.s32.totalorder %v995, 1
  %vm1012 = vcmp.eq.s32.totalorder %v996, 1
  %vm1013 = vcmp.eq.s32.totalorder %v997, 1
  %v1014 = vsel %vm998, 0.0, %v981
  %v1015 = vsel %vm999, 0.0, %v980
  %v1016 = vsel %vm1000, 0.0, %v979
  %v1017 = vsel %vm1001, 0.0, %v978
  %v1018 = vsel %vm1002, 0.0, %v977
  %v1019 = vsel %vm1003, 0.0, %v976
  %v1020 = vsel %vm1004, 0.0, %v975
  %v1021 = vsel %vm1005, 0.0, %v974
  %v1022 = vsel %vm1006, 0.0, %v973
  %v1023 = vsel %vm1007, 0.0, %v972
  %v1024 = vsel %vm1008, 0.0, %v971
  %v1025 = vsel %vm1009, 0.0, %v970
  %v1026 = vsel %vm1010, 0.0, %v969
  %v1027 = vsel %vm1011, 0.0, %v968
  %v1028 = vsel %vm1012, 0.0, %v967
  %v1029 = vsel %vm1013, 0.0, %v966
  %v1030 = vrot.slane %v929, 1
  %v1031 = vrot.slane %v930, 1
  %v1032 = vrot.slane %v931, 1
  %v1033 = vrot.slane %v932, 1
  %v1034 = vrot.slane %v933, 1
  %v1035 = vrot.slane %v934, 1
  %v1036 = vrot.slane %v935, 1
  %v1037 = vrot.slane %v936, 1
  %v1038 = vrot.slane %v937, 1
  %v1039 = vrot.slane %v938, 1
  %v1040 = vrot.slane %v939, 1
  %v1041 = vrot.slane %v940, 1
  %v1042 = vrot.slane %v941, 1
  %v1043 = vrot.slane %v942, 1
  %v1044 = vrot.slane %v943, 1
  %v1045 = vrot.slane %v944, 1
  %vm1046 = vcmp.lt.s32.totalorder %v18, 7
  %v1047 = vsel %vm1046, %v1044, %v1045
  %v1048 = vsel %vm1046, %v1043, %v1044
  %v1049 = vsel %vm1046, %v1042, %v1043
  %v1050 = vsel %vm1046, %v1041, %v1042
  %v1051 = vsel %vm1046, %v1040, %v1041
  %v1052 = vsel %vm1046, %v1039, %v1040
  %v1053 = vsel %vm1046, %v1038, %v1039
  %v1054 = vsel %vm1046, %v1037, %v1038
  %v1055 = vsel %vm1046, %v1036, %v1037
  %v1056 = vsel %vm1046, %v1035, %v1036
  %v1057 = vsel %vm1046, %v1034, %v1035
  %v1058 = vsel %vm1046, %v1033, %v1034
  %v1059 = vsel %vm1046, %v1032, %v1033
  %v1060 = vsel %vm1046, %v1031, %v1032
  %v1061 = vsel %vm1046, %v1030, %v1031
  %v1062 = vsel %vm1046, %v1045, %v1030
  %v1063 = vsel %vm770, 1, 0
  %v1064 = vsel %vm771, 1, 0
  %v1065 = vsel %vm772, 1, 0
  %v1066 = vsel %vm773, 1, 0
  %v1067 = vsel %vm774, 1, 0
  %v1068 = vsel %vm775, 1, 0
  %v1069 = vsel %vm776, 1, 0
  %v1070 = vsel %vm777, 1, 0
  %v1071 = vsel %vm778, 1, 0
  %v1072 = vsel %vm779, 1, 0
  %v1073 = vsel %vm780, 1, 0
  %v1074 = vsel %vm781, 1, 0
  %v1075 = vsel %vm782, 1, 0
  %v1076 = vsel %vm783, 1, 0
  %v1077 = vsel %vm784, 1, 0
  %v1078 = vsel %vm785, 1, 0
  %vm1079 = vcmp.eq.s32.totalorder %v1063, 1
  %vm1080 = vcmp.eq.s32.totalorder %v1064, 1
  %vm1081 = vcmp.eq.s32.totalorder %v1065, 1
  %vm1082 = vcmp.eq.s32.totalorder %v1066, 1
  %vm1083 = vcmp.eq.s32.totalorder %v1067, 1
  %vm1084 = vcmp.eq.s32.totalorder %v1068, 1
  %vm1085 = vcmp.eq.s32.totalorder %v1069, 1
  %vm1086 = vcmp.eq.s32.totalorder %v1070, 1
  %vm1087 = vcmp.eq.s32.totalorder %v1071, 1
  %vm1088 = vcmp.eq.s32.totalorder %v1072, 1
  %vm1089 = vcmp.eq.s32.totalorder %v1073, 1
  %vm1090 = vcmp.eq.s32.totalorder %v1074, 1
  %vm1091 = vcmp.eq.s32.totalorder %v1075, 1
  %vm1092 = vcmp.eq.s32.totalorder %v1076, 1
  %vm1093 = vcmp.eq.s32.totalorder %v1077, 1
  %vm1094 = vcmp.eq.s32.totalorder %v1078, 1
  %v1095 = vsel %vm1079, 0.0, %v1061
  %v1096 = vsel %vm1080, 0.0, %v1060
  %v1097 = vsel %vm1081, 0.0, %v1059
  %v1098 = vsel %vm1082, 0.0, %v1058
  %v1099 = vsel %vm1083, 0.0, %v1057
  %v1100 = vsel %vm1084, 0.0, %v1056
  %v1101 = vsel %vm1085, 0.0, %v1055
  %v1102 = vsel %vm1086, 0.0, %v1054
  %v1103 = vsel %vm1087, 0.0, %v1053
  %v1104 = vsel %vm1088, 0.0, %v1052
  %v1105 = vsel %vm1089, 0.0, %v1051
  %v1106 = vsel %vm1090, 0.0, %v1050
  %v1107 = vsel %vm1091, 0.0, %v1049
  %v1108 = vsel %vm1092, 0.0, %v1048
  %v1109 = vsel %vm1093, 0.0, %v1047
  %v1110 = vsel %vm1094, 0.0, %v1062
  %v1111 = vpack.c.bf16 %v1014, %v1014
  %v1112 = vpack.c.bf16 %v1015, %v1015
  %v1113 = vpack.c.bf16 %v1016, %v1016
  %v1114 = vpack.c.bf16 %v1017, %v1017
  %v1115 = vpack.c.bf16 %v1018, %v1018
  %v1116 = vpack.c.bf16 %v1019, %v1019
  %v1117 = vpack.c.bf16 %v1020, %v1020
  %v1118 = vpack.c.bf16 %v1021, %v1021
  %v1119 = vpack.c.bf16 %v1022, %v1022
  %v1120 = vpack.c.bf16 %v1023, %v1023
  %v1121 = vpack.c.bf16 %v1024, %v1024
  %v1122 = vpack.c.bf16 %v1025, %v1025
  %v1123 = vpack.c.bf16 %v1026, %v1026
  %v1124 = vpack.c.bf16 %v1027, %v1027
  %v1125 = vpack.c.bf16 %v1028, %v1028
  %v1126 = vpack.c.bf16 %v1029, %v1029
  %v1127 = vpack.c.bf16 %v929, %v929
  %v1128 = vpack.c.bf16 %v930, %v930
  %v1129 = vpack.c.bf16 %v931, %v931
  %v1130 = vpack.c.bf16 %v932, %v932
  %v1131 = vpack.c.bf16 %v933, %v933
  %v1132 = vpack.c.bf16 %v934, %v934
  %v1133 = vpack.c.bf16 %v935, %v935
  %v1134 = vpack.c.bf16 %v936, %v936
  %v1135 = vpack.c.bf16 %v937, %v937
  %v1136 = vpack.c.bf16 %v938, %v938
  %v1137 = vpack.c.bf16 %v939, %v939
  %v1138 = vpack.c.bf16 %v940, %v940
  %v1139 = vpack.c.bf16 %v941, %v941
  %v1140 = vpack.c.bf16 %v942, %v942
  %v1141 = vpack.c.bf16 %v943, %v943
  %v1142 = vpack.c.bf16 %v944, %v944
  %v1143 = vpack.c.bf16 %v1095, %v1095
  %v1144 = vpack.c.bf16 %v1096, %v1096
  %v1145 = vpack.c.bf16 %v1097, %v1097
  %v1146 = vpack.c.bf16 %v1098, %v1098
  %v1147 = vpack.c.bf16 %v1099, %v1099
  %v1148 = vpack.c.bf16 %v1100, %v1100
  %v1149 = vpack.c.bf16 %v1101, %v1101
  %v1150 = vpack.c.bf16 %v1102, %v1102
  %v1151 = vpack.c.bf16 %v1103, %v1103
  %v1152 = vpack.c.bf16 %v1104, %v1104
  %v1153 = vpack.c.bf16 %v1105, %v1105
  %v1154 = vpack.c.bf16 %v1106, %v1106
  %v1155 = vpack.c.bf16 %v1107, %v1107
  %v1156 = vpack.c.bf16 %v1108, %v1108
  %v1157 = vpack.c.bf16 %v1109, %v1109
  %v1158 = vpack.c.bf16 %v1110, %v1110
  %v1175 = vunpack.c.l.b16 %v1111
  %v1176 = vunpack.c.l.b16 %v1112
  %v1177 = vunpack.c.l.b16 %v1113
  %v1178 = vunpack.c.l.b16 %v1114
  %v1179 = vunpack.c.l.b16 %v1115
  %v1180 = vunpack.c.l.b16 %v1116
  %v1181 = vunpack.c.l.b16 %v1117
  %v1182 = vunpack.c.l.b16 %v1118
  %v1183 = vunpack.c.l.b16 %v1119
  %v1184 = vunpack.c.l.b16 %v1120
  %v1185 = vunpack.c.l.b16 %v1121
  %v1186 = vunpack.c.l.b16 %v1122
  %v1187 = vunpack.c.l.b16 %v1123
  %v1188 = vunpack.c.l.b16 %v1124
  %v1189 = vunpack.c.l.b16 %v1125
  %v1190 = vunpack.c.l.b16 %v1126
  %v1191 = vpack.c.b16 %v1176, %v1175
  %v1192 = vpack.c.b16 %v1178, %v1177
  %v1193 = vpack.c.b16 %v1180, %v1179
  %v1194 = vpack.c.b16 %v1182, %v1181
  %v1195 = vpack.c.b16 %v1184, %v1183
  %v1196 = vpack.c.b16 %v1186, %v1185
  %v1197 = vpack.c.b16 %v1188, %v1187
  %v1198 = vpack.c.b16 %v1190, %v1189
  %v1223 = vunpack.c.l.b16 %v1127
  %v1224 = vunpack.c.l.b16 %v1128
  %v1225 = vunpack.c.l.b16 %v1129
  %v1226 = vunpack.c.l.b16 %v1130
  %v1227 = vunpack.c.l.b16 %v1131
  %v1228 = vunpack.c.l.b16 %v1132
  %v1229 = vunpack.c.l.b16 %v1133
  %v1230 = vunpack.c.l.b16 %v1134
  %v1231 = vunpack.c.l.b16 %v1135
  %v1232 = vunpack.c.l.b16 %v1136
  %v1233 = vunpack.c.l.b16 %v1137
  %v1234 = vunpack.c.l.b16 %v1138
  %v1235 = vunpack.c.l.b16 %v1139
  %v1236 = vunpack.c.l.b16 %v1140
  %v1237 = vunpack.c.l.b16 %v1141
  %v1238 = vunpack.c.l.b16 %v1142
  %v1239 = vpack.c.b16 %v1224, %v1223
  %v1240 = vpack.c.b16 %v1226, %v1225
  %v1241 = vpack.c.b16 %v1228, %v1227
  %v1242 = vpack.c.b16 %v1230, %v1229
  %v1243 = vpack.c.b16 %v1232, %v1231
  %v1244 = vpack.c.b16 %v1234, %v1233
  %v1245 = vpack.c.b16 %v1236, %v1235
  %v1246 = vpack.c.b16 %v1238, %v1237
  %v1271 = vunpack.c.l.b16 %v1143
  %v1272 = vunpack.c.l.b16 %v1144
  %v1273 = vunpack.c.l.b16 %v1145
  %v1274 = vunpack.c.l.b16 %v1146
  %v1275 = vunpack.c.l.b16 %v1147
  %v1276 = vunpack.c.l.b16 %v1148
  %v1277 = vunpack.c.l.b16 %v1149
  %v1278 = vunpack.c.l.b16 %v1150
  %v1279 = vunpack.c.l.b16 %v1151
  %v1280 = vunpack.c.l.b16 %v1152
  %v1281 = vunpack.c.l.b16 %v1153
  %v1282 = vunpack.c.l.b16 %v1154
  %v1283 = vunpack.c.l.b16 %v1155
  %v1284 = vunpack.c.l.b16 %v1156
  %v1285 = vunpack.c.l.b16 %v1157
  %v1286 = vunpack.c.l.b16 %v1158
  %v1287 = vpack.c.b16 %v1272, %v1271
  %v1288 = vpack.c.b16 %v1274, %v1273
  %v1289 = vpack.c.b16 %v1276, %v1275
  %v1290 = vpack.c.b16 %v1278, %v1277
  %v1291 = vpack.c.b16 %v1280, %v1279
  %v1292 = vpack.c.b16 %v1282, %v1281
  %v1293 = vpack.c.b16 %v1284, %v1283
  %v1294 = vpack.c.b16 %v1286, %v1285
  %v1303 = vld [vmem:[%s1] sm:$0xf]
  %v1304 = vld [vmem:[%s1 + $0x4] sm:$0xf]
  %v1305 = vld [vmem:[%s1 + $0x8] sm:$0xf]
  %v1306 = vld [vmem:[%s1 + $0xc] sm:$0xf]
  %v1307 = vld [vmem:[%s1 + $0x10] sm:$0xf]
  %v1308 = vld [vmem:[%s1 + $0x14] sm:$0xf]
  %v1309 = vld [vmem:[%s1 + $0x18] sm:$0xf]
  %v1310 = vld [vmem:[%s1 + $0x1c] sm:$0xf]
  %v1311 = vld [vmem:[%s1 + $0x20] sm:$0xf]
  %v1312 = vld [vmem:[%s1 + $0x24] sm:$0xf]
  %v1313 = vld [vmem:[%s1 + $0x28] sm:$0xf]
  %v1314 = vld [vmem:[%s1 + $0x2c] sm:$0xf]
  %v1315 = vld [vmem:[%s1 + $0x30] sm:$0xf]
  %v1316 = vld [vmem:[%s1 + $0x34] sm:$0xf]
  %v1317 = vld [vmem:[%s1 + $0x38] sm:$0xf]
  %v1318 = vld [vmem:[%s1 + $0x3c] sm:$0xf]
  %v1319 = vld [vmem:[%s1 + $0x40] sm:$0xf]
  %v1320 = vld [vmem:[%s1 + $0x44] sm:$0xf]
  %v1321 = vld [vmem:[%s1 + $0x48] sm:$0xf]
  %v1322 = vld [vmem:[%s1 + $0x4c] sm:$0xf]
  %v1323 = vld [vmem:[%s1 + $0x50] sm:$0xf]
  %v1324 = vld [vmem:[%s1 + $0x54] sm:$0xf]
  %v1325 = vld [vmem:[%s1 + $0x58] sm:$0xf]
  %v1326 = vld [vmem:[%s1 + $0x5c] sm:$0xf]
  %v1327 = vld [vmem:[%s1 + $0x60] sm:$0xf]
  %v1328 = vld [vmem:[%s1 + $0x64] sm:$0xf]
  %v1329 = vld [vmem:[%s1 + $0x68] sm:$0xf]
  %v1330 = vld [vmem:[%s1 + $0x6c] sm:$0xf]
  %v1331 = vld [vmem:[%s1 + $0x70] sm:$0xf]
  %v1332 = vld [vmem:[%s1 + $0x74] sm:$0xf]
  %v1333 = vld [vmem:[%s1 + $0x78] sm:$0xf]
  %v1334 = vld [vmem:[%s1 + $0x7c] sm:$0xf]
  %v1335 = vld [vmem:[%s1 + $0x80] sm:$0xf]
  %v1336 = vld [vmem:[%s1 + $0x84] sm:$0xf]
  %v1337 = vld [vmem:[%s1 + $0x88] sm:$0xf]
  %v1338 = vld [vmem:[%s1 + $0x8c] sm:$0xf]
  %v1339 = vld [vmem:[%s1 + $0x90] sm:$0xf]
  %v1340 = vld [vmem:[%s1 + $0x94] sm:$0xf]
  %v1341 = vld [vmem:[%s1 + $0x98] sm:$0xf]
  %v1342 = vld [vmem:[%s1 + $0x9c] sm:$0xf]
  %v1343 = vld [vmem:[%s1 + $0xa0] sm:$0xf]
  %v1344 = vld [vmem:[%s1 + $0xa4] sm:$0xf]
  %v1345 = vld [vmem:[%s1 + $0xa8] sm:$0xf]
  %v1346 = vld [vmem:[%s1 + $0xac] sm:$0xf]
  %v1347 = vld [vmem:[%s1 + $0xb0] sm:$0xf]
  %v1348 = vld [vmem:[%s1 + $0xb4] sm:$0xf]
  %v1349 = vld [vmem:[%s1 + $0xb8] sm:$0xf]
  %v1350 = vld [vmem:[%s1 + $0xbc] sm:$0xf]
  %v1399 = vunpack.c.l.b16 %v1303
  %v1400 = vunpack.c.l.b16 %v1304
  %v1401 = vunpack.c.l.b16 %v1305
  %v1402 = vunpack.c.l.b16 %v1306
  %v1403 = vunpack.c.l.b16 %v1307
  %v1404 = vunpack.c.l.b16 %v1308
  %v1405 = vunpack.c.l.b16 %v1309
  %v1406 = vunpack.c.l.b16 %v1310
  %v1407 = vunpack.c.l.b16 %v1311
  %v1408 = vunpack.c.l.b16 %v1312
  %v1409 = vunpack.c.l.b16 %v1313
  %v1410 = vunpack.c.l.b16 %v1314
  %v1411 = vunpack.c.l.b16 %v1315
  %v1412 = vunpack.c.l.b16 %v1316
  %v1413 = vunpack.c.l.b16 %v1317
  %v1414 = vunpack.c.l.b16 %v1318
  %v1415 = vunpack.c.l.b16 %v1319
  %v1416 = vunpack.c.l.b16 %v1320
  %v1417 = vunpack.c.l.b16 %v1321
  %v1418 = vunpack.c.l.b16 %v1322
  %v1419 = vunpack.c.l.b16 %v1323
  %v1420 = vunpack.c.l.b16 %v1324
  %v1421 = vunpack.c.l.b16 %v1325
  %v1422 = vunpack.c.l.b16 %v1326
  %v1423 = vunpack.c.l.b16 %v1327
  %v1424 = vunpack.c.l.b16 %v1328
  %v1425 = vunpack.c.l.b16 %v1329
  %v1426 = vunpack.c.l.b16 %v1330
  %v1427 = vunpack.c.l.b16 %v1331
  %v1428 = vunpack.c.l.b16 %v1332
  %v1429 = vunpack.c.l.b16 %v1333
  %v1430 = vunpack.c.l.b16 %v1334
  %v1431 = vunpack.c.l.b16 %v1335
  %v1432 = vunpack.c.l.b16 %v1336
  %v1433 = vunpack.c.l.b16 %v1337
  %v1434 = vunpack.c.l.b16 %v1338
  %v1435 = vunpack.c.l.b16 %v1339
  %v1436 = vunpack.c.l.b16 %v1340
  %v1437 = vunpack.c.l.b16 %v1341
  %v1438 = vunpack.c.l.b16 %v1342
  %v1439 = vunpack.c.l.b16 %v1343
  %v1440 = vunpack.c.l.b16 %v1344
  %v1441 = vunpack.c.l.b16 %v1345
  %v1442 = vunpack.c.l.b16 %v1346
  %v1443 = vunpack.c.l.b16 %v1347
  %v1444 = vunpack.c.l.b16 %v1348
  %v1445 = vunpack.c.l.b16 %v1349
  %v1446 = vunpack.c.l.b16 %v1350
  %v1447 = vpack.c.b16 %v1400, %v1399
  %v1448 = vpack.c.b16 %v1402, %v1401
  %v1449 = vpack.c.b16 %v1404, %v1403
  %v1450 = vpack.c.b16 %v1406, %v1405
  %v1451 = vpack.c.b16 %v1408, %v1407
  %v1452 = vpack.c.b16 %v1410, %v1409
  %v1453 = vpack.c.b16 %v1412, %v1411
  %v1454 = vpack.c.b16 %v1414, %v1413
  %v1455 = vpack.c.b16 %v1416, %v1415
  %v1456 = vpack.c.b16 %v1418, %v1417
  %v1457 = vpack.c.b16 %v1420, %v1419
  %v1458 = vpack.c.b16 %v1422, %v1421
  %v1459 = vpack.c.b16 %v1424, %v1423
  %v1460 = vpack.c.b16 %v1426, %v1425
  %v1461 = vpack.c.b16 %v1428, %v1427
  %v1462 = vpack.c.b16 %v1430, %v1429
  %v1463 = vpack.c.b16 %v1432, %v1431
  %v1464 = vpack.c.b16 %v1434, %v1433
  %v1465 = vpack.c.b16 %v1436, %v1435
  %v1466 = vpack.c.b16 %v1438, %v1437
  %v1467 = vpack.c.b16 %v1440, %v1439
  %v1468 = vpack.c.b16 %v1442, %v1441
  %v1469 = vpack.c.b16 %v1444, %v1443
  %v1470 = vpack.c.b16 %v1446, %v1445
  %1495 = vmatpush.bf16.msra.mxu0 %v1454
  %1496 = vmatpush.bf16.msra.mxu0 %v1453
  %1497 = vmatpush.bf16.msra.mxu0 %v1452
  %1498 = vmatpush.bf16.msra.mxu0 %v1451
  %1499 = vmatpush.bf16.msra.mxu0 %v1450
  %1500 = vmatpush.bf16.msra.mxu0 %v1449
  %1501 = vmatpush.bf16.msra.mxu0 %v1448
  %1502 = vmatpush.bf16.msra.mxu0 %v1447
  %1503 = vmatmul.bf16.gmra.mxu0 %v1191
  %v1504 = vpop.f32.mrf.mxu0
  %v1505 = vadd.f32 0.0, %v1504
  %v1506 = vpop.f32.mrf.mxu0
  %v1507 = vadd.f32 0.0, %v1506
  %1508 = vmatmul.bf16.gmra.mxu0 %v1192
  %v1509 = vpop.f32.mrf.mxu0
  %v1510 = vadd.f32 0.0, %v1509
  %v1511 = vpop.f32.mrf.mxu0
  %v1512 = vadd.f32 0.0, %v1511
  %1513 = vmatmul.bf16.gmra.mxu0 %v1193
  %v1514 = vpop.f32.mrf.mxu0
  %v1515 = vadd.f32 0.0, %v1514
  %v1516 = vpop.f32.mrf.mxu0
  %v1517 = vadd.f32 0.0, %v1516
  %1518 = vmatmul.bf16.gmra.mxu0 %v1194
  %v1519 = vpop.f32.mrf.mxu0
  %v1520 = vadd.f32 0.0, %v1519
  %v1521 = vpop.f32.mrf.mxu0
  %v1522 = vadd.f32 0.0, %v1521
  %1523 = vmatmul.bf16.gmra.mxu0 %v1195
  %v1524 = vpop.f32.mrf.mxu0
  %v1525 = vadd.f32 0.0, %v1524
  %v1526 = vpop.f32.mrf.mxu0
  %v1527 = vadd.f32 0.0, %v1526
  %1528 = vmatmul.bf16.gmra.mxu0 %v1196
  %v1529 = vpop.f32.mrf.mxu0
  %v1530 = vadd.f32 0.0, %v1529
  %v1531 = vpop.f32.mrf.mxu0
  %v1532 = vadd.f32 0.0, %v1531
  %1533 = vmatmul.bf16.gmra.mxu0 %v1197
  %v1534 = vpop.f32.mrf.mxu0
  %v1535 = vadd.f32 0.0, %v1534
  %v1536 = vpop.f32.mrf.mxu0
  %v1537 = vadd.f32 0.0, %v1536
  %1538 = vmatmul.bf16.gmra.mxu0 %v1198
  %v1539 = vpop.f32.mrf.mxu0
  %v1540 = vadd.f32 0.0, %v1539
  %v1541 = vpop.f32.mrf.mxu0
  %v1542 = vadd.f32 0.0, %v1541
  %1543 = vdwg.mxu0
  %1544 = vmatpush.bf16.msra.mxu0 %v1462
  %1545 = vmatpush.bf16.msra.mxu0 %v1461
  %1546 = vmatpush.bf16.msra.mxu0 %v1460
  %1547 = vmatpush.bf16.msra.mxu0 %v1459
  %1548 = vmatpush.bf16.msra.mxu0 %v1458
  %1549 = vmatpush.bf16.msra.mxu0 %v1457
  %1550 = vmatpush.bf16.msra.mxu0 %v1456
  %1551 = vmatpush.bf16.msra.mxu0 %v1455
  %1552 = vmatmul.bf16.gmra.mxu0 %v1239
  %v1553 = vpop.f32.mrf.mxu0
  %v1554 = vadd.f32 %v1505, %v1553
  %v1555 = vpop.f32.mrf.mxu0
  %v1556 = vadd.f32 %v1507, %v1555
  %1557 = vmatmul.bf16.gmra.mxu0 %v1240
  %v1558 = vpop.f32.mrf.mxu0
  %v1559 = vadd.f32 %v1510, %v1558
  %v1560 = vpop.f32.mrf.mxu0
  %v1561 = vadd.f32 %v1512, %v1560
  %1562 = vmatmul.bf16.gmra.mxu0 %v1241
  %v1563 = vpop.f32.mrf.mxu0
  %v1564 = vadd.f32 %v1515, %v1563
  %v1565 = vpop.f32.mrf.mxu0
  %v1566 = vadd.f32 %v1517, %v1565
  %1567 = vmatmul.bf16.gmra.mxu0 %v1242
  %v1568 = vpop.f32.mrf.mxu0
  %v1569 = vadd.f32 %v1520, %v1568
  %v1570 = vpop.f32.mrf.mxu0
  %v1571 = vadd.f32 %v1522, %v1570
  %1572 = vmatmul.bf16.gmra.mxu0 %v1243
  %v1573 = vpop.f32.mrf.mxu0
  %v1574 = vadd.f32 %v1525, %v1573
  %v1575 = vpop.f32.mrf.mxu0
  %v1576 = vadd.f32 %v1527, %v1575
  %1577 = vmatmul.bf16.gmra.mxu0 %v1244
  %v1578 = vpop.f32.mrf.mxu0
  %v1579 = vadd.f32 %v1530, %v1578
  %v1580 = vpop.f32.mrf.mxu0
  %v1581 = vadd.f32 %v1532, %v1580
  %1582 = vmatmul.bf16.gmra.mxu0 %v1245
  %v1583 = vpop.f32.mrf.mxu0
  %v1584 = vadd.f32 %v1535, %v1583
  %v1585 = vpop.f32.mrf.mxu0
  %v1586 = vadd.f32 %v1537, %v1585
  %1587 = vmatmul.bf16.gmra.mxu0 %v1246
  %v1588 = vpop.f32.mrf.mxu0
  %v1589 = vadd.f32 %v1540, %v1588
  %v1590 = vpop.f32.mrf.mxu0
  %v1591 = vadd.f32 %v1542, %v1590
  %1592 = vdwg.mxu0
  %1593 = vmatpush.bf16.msra.mxu0 %v1470
  %1594 = vmatpush.bf16.msra.mxu0 %v1469
  %1595 = vmatpush.bf16.msra.mxu0 %v1468
  %1596 = vmatpush.bf16.msra.mxu0 %v1467
  %1597 = vmatpush.bf16.msra.mxu0 %v1466
  %1598 = vmatpush.bf16.msra.mxu0 %v1465
  %1599 = vmatpush.bf16.msra.mxu0 %v1464
  %1600 = vmatpush.bf16.msra.mxu0 %v1463
  %1601 = vmatmul.bf16.gmra.mxu0 %v1287
  %v1602 = vpop.f32.mrf.mxu0
  %v1603 = vadd.f32 %v1554, %v1602
  %v1604 = vpop.f32.mrf.mxu0
  %v1605 = vadd.f32 %v1556, %v1604
  %1606 = vmatmul.bf16.gmra.mxu0 %v1288
  %v1607 = vpop.f32.mrf.mxu0
  %v1608 = vadd.f32 %v1559, %v1607
  %v1609 = vpop.f32.mrf.mxu0
  %v1610 = vadd.f32 %v1561, %v1609
  %1611 = vmatmul.bf16.gmra.mxu0 %v1289
  %v1612 = vpop.f32.mrf.mxu0
  %v1613 = vadd.f32 %v1564, %v1612
  %v1614 = vpop.f32.mrf.mxu0
  %v1615 = vadd.f32 %v1566, %v1614
  %1616 = vmatmul.bf16.gmra.mxu0 %v1290
  %v1617 = vpop.f32.mrf.mxu0
  %v1618 = vadd.f32 %v1569, %v1617
  %v1619 = vpop.f32.mrf.mxu0
  %v1620 = vadd.f32 %v1571, %v1619
  %1621 = vmatmul.bf16.gmra.mxu0 %v1291
  %v1622 = vpop.f32.mrf.mxu0
  %v1623 = vadd.f32 %v1574, %v1622
  %v1624 = vpop.f32.mrf.mxu0
  %v1625 = vadd.f32 %v1576, %v1624
  %1626 = vmatmul.bf16.gmra.mxu0 %v1292
  %v1627 = vpop.f32.mrf.mxu0
  %v1628 = vadd.f32 %v1579, %v1627
  %v1629 = vpop.f32.mrf.mxu0
  %v1630 = vadd.f32 %v1581, %v1629
  %1631 = vmatmul.bf16.gmra.mxu0 %v1293
  %v1632 = vpop.f32.mrf.mxu0
  %v1633 = vadd.f32 %v1584, %v1632
  %v1634 = vpop.f32.mrf.mxu0
  %v1635 = vadd.f32 %v1586, %v1634
  %1636 = vmatmul.bf16.gmra.mxu0 %v1294
  %v1637 = vpop.f32.mrf.mxu0
  %v1638 = vadd.f32 %v1589, %v1637
  %v1639 = vpop.f32.mrf.mxu0
  %v1640 = vadd.f32 %v1591, %v1639
  %1641 = vdwg.mxu0
  %v1642 = vadd.f32 %v1603, %v1605
  %v1643 = vadd.f32 %v1642, %v1608
  %v1644 = vadd.f32 %v1643, %v1610
  %v1645 = vadd.f32 %v1644, %v1613
  %v1646 = vadd.f32 %v1645, %v1615
  %v1647 = vadd.f32 %v1646, %v1618
  %v1648 = vadd.f32 %v1647, %v1620
  %v1649 = vadd.f32 %v1648, %v1623
  %v1650 = vadd.f32 %v1649, %v1625
  %v1651 = vadd.f32 %v1650, %v1628
  %v1652 = vadd.f32 %v1651, %v1630
  %v1653 = vadd.f32 %v1652, %v1633
  %v1654 = vadd.f32 %v1653, %v1635
  %v1655 = vadd.f32 %v1654, %v1638
  %v1656 = vadd.f32 %v1655, %v1640
  %v1657 = vrot.slane %v1656, 4
  %v1658 = vadd.f32 %v1656, %v1657
  %v1659 = vrot.slane %v1658, 2
  %v1660 = vadd.f32 %v1658, %v1659
  %v1661 = vrot.slane %v1660, 1
  %v1662 = vadd.f32 %v1660, %v1661
  %1663 = vrot.lane.b32.xlu0 %v1662, 8
  %v1664 = vpop.permute.xlu0 %1663
  %v1665 = vadd.f32 %v1662, %v1664
  %1666 = vrot.lane.b32.xlu0 %v1665, 16
  %v1667 = vpop.permute.xlu0 %1666
  %v1668 = vadd.f32 %v1665, %v1667
  %1669 = vrot.lane.b32.xlu0 %v1668, 32
  %v1670 = vpop.permute.xlu0 %1669
  %v1671 = vadd.f32 %v1668, %v1670
  %1672 = vrot.lane.b32.xlu0 %v1671, 64
  %v1673 = vpop.permute.xlu0 %1672
  %v1674 = vadd.f32 %v1671, %v1673
  %v1675 = vmul.f32 %v1603, %v1603
  %v1676 = vmul.f32 %v1605, %v1605
  %v1677 = vmul.f32 %v1608, %v1608
  %v1678 = vmul.f32 %v1610, %v1610
  %v1679 = vmul.f32 %v1613, %v1613
  %v1680 = vmul.f32 %v1615, %v1615
  %v1681 = vmul.f32 %v1618, %v1618
  %v1682 = vmul.f32 %v1620, %v1620
  %v1683 = vmul.f32 %v1623, %v1623
  %v1684 = vmul.f32 %v1625, %v1625
  %v1685 = vmul.f32 %v1628, %v1628
  %v1686 = vmul.f32 %v1630, %v1630
  %v1687 = vmul.f32 %v1633, %v1633
  %v1688 = vmul.f32 %v1635, %v1635
  %v1689 = vmul.f32 %v1638, %v1638
  %v1690 = vmul.f32 %v1640, %v1640
  %v1691 = vadd.f32 %v1675, %v1676
  %v1692 = vadd.f32 %v1691, %v1677
  %v1693 = vadd.f32 %v1692, %v1678
  %v1694 = vadd.f32 %v1693, %v1679
  %v1695 = vadd.f32 %v1694, %v1680
  %v1696 = vadd.f32 %v1695, %v1681
  %v1697 = vadd.f32 %v1696, %v1682
  %v1698 = vadd.f32 %v1697, %v1683
  %v1699 = vadd.f32 %v1698, %v1684
  %v1700 = vadd.f32 %v1699, %v1685
  %v1701 = vadd.f32 %v1700, %v1686
  %v1702 = vadd.f32 %v1701, %v1687
  %v1703 = vadd.f32 %v1702, %v1688
  %v1704 = vadd.f32 %v1703, %v1689
  %v1705 = vadd.f32 %v1704, %v1690
  %v1706 = vrot.slane %v1705, 4
  %v1707 = vadd.f32 %v1705, %v1706
  %v1708 = vrot.slane %v1707, 2
  %v1709 = vadd.f32 %v1707, %v1708
  %v1710 = vrot.slane %v1709, 1
  %v1711 = vadd.f32 %v1709, %v1710
  %1712 = vrot.lane.b32.xlu0 %v1711, 8
  %v1713 = vpop.permute.xlu0 %1712
  %v1714 = vadd.f32 %v1711, %v1713
  %1715 = vrot.lane.b32.xlu0 %v1714, 16
  %v1716 = vpop.permute.xlu0 %1715
  %v1717 = vadd.f32 %v1714, %v1716
  %1718 = vrot.lane.b32.xlu0 %v1717, 32
  %v1719 = vpop.permute.xlu0 %1718
  %v1720 = vadd.f32 %v1717, %v1719
  %1721 = vrot.lane.b32.xlu0 %v1720, 64
  %v1722 = vpop.permute.xlu0 %1721
  %v1723 = vadd.f32 %v1720, %v1722
  %v1724 = vmul.f32 %v1674, 0.00048828125
  %v1725 = vmul.f32 %v1723, 0.00048828125
  %v1726 = vmul.f32 %v1724, %v1724
  %v1727 = vsub.f32 %v1725, %v1726
  %v1728 = vadd.f32 %v1727, 1e-05
  %v1729 = vrsqrt.pop %v1728
  %v1730 = vmul.f32 %v1729, %v1728
  %v1731 = vmul.f32 %v1730, %v1729
  %v1732 = vmul.f32 0.5, %v1731
  %v1733 = vsub.f32 1.5, %v1732
  %v1734 = vmul.f32 %v1729, %v1733
  %vm1735 = vweird.f32 %v1728
  %vm1736 = vweird.f32 %v1729
  %vm1737 = vmor %vm1735, %vm1736
  %v1738 = vsel %vm1737, %v1729, %v1734
  %v1739 = vperm.slane %v1724, 0
  %v1740 = vsub.f32 %v1603, %v1739
  %v1741 = vsub.f32 %v1605, %v1739
  %v1742 = vsub.f32 %v1608, %v1739
  %v1743 = vsub.f32 %v1610, %v1739
  %v1744 = vsub.f32 %v1613, %v1739
  %v1745 = vsub.f32 %v1615, %v1739
  %v1746 = vsub.f32 %v1618, %v1739
  %v1747 = vsub.f32 %v1620, %v1739
  %v1748 = vsub.f32 %v1623, %v1739
  %v1749 = vsub.f32 %v1625, %v1739
  %v1750 = vsub.f32 %v1628, %v1739
  %v1751 = vsub.f32 %v1630, %v1739
  %v1752 = vsub.f32 %v1633, %v1739
  %v1753 = vsub.f32 %v1635, %v1739
  %v1754 = vsub.f32 %v1638, %v1739
  %v1755 = vsub.f32 %v1640, %v1739
  %v1756 = vmul.f32 %v1738, %v945
  %v1757 = vperm.slane %v1756, 0
  %v1758 = vmul.f32 %v1740, %v1757
  %v1759 = vmul.f32 %v1741, %v1757
  %v1760 = vmul.f32 %v1742, %v1757
  %v1761 = vmul.f32 %v1743, %v1757
  %v1762 = vmul.f32 %v1744, %v1757
  %v1763 = vmul.f32 %v1745, %v1757
  %v1764 = vmul.f32 %v1746, %v1757
  %v1765 = vmul.f32 %v1747, %v1757
  %v1766 = vmul.f32 %v1748, %v1757
  %v1767 = vmul.f32 %v1749, %v1757
  %v1768 = vmul.f32 %v1750, %v1757
  %v1769 = vmul.f32 %v1751, %v1757
  %v1770 = vmul.f32 %v1752, %v1757
  %v1771 = vmul.f32 %v1753, %v1757
  %v1772 = vmul.f32 %v1754, %v1757
  %v1773 = vmul.f32 %v1755, %v1757
  %v1774 = vperm.slane %v946, 0
  %v1775 = vadd.f32 %v1758, %v1774
  %v1776 = vadd.f32 %v1759, %v1774
  %v1777 = vadd.f32 %v1760, %v1774
  %v1778 = vadd.f32 %v1761, %v1774
  %v1779 = vadd.f32 %v1762, %v1774
  %v1780 = vadd.f32 %v1763, %v1774
  %v1781 = vadd.f32 %v1764, %v1774
  %v1782 = vadd.f32 %v1765, %v1774
  %v1783 = vadd.f32 %v1766, %v1774
  %v1784 = vadd.f32 %v1767, %v1774
  %v1785 = vadd.f32 %v1768, %v1774
  %v1786 = vadd.f32 %v1769, %v1774
  %v1787 = vadd.f32 %v1770, %v1774
  %v1788 = vadd.f32 %v1771, %v1774
  %v1789 = vadd.f32 %v1772, %v1774
  %v1790 = vadd.f32 %v1773, %v1774
  %v1791 = vmax.f32 %v1775, 0.0
  %v1792 = vmax.f32 %v1776, 0.0
  %v1793 = vmax.f32 %v1777, 0.0
  %v1794 = vmax.f32 %v1778, 0.0
  %v1795 = vmax.f32 %v1779, 0.0
  %v1796 = vmax.f32 %v1780, 0.0
  %v1797 = vmax.f32 %v1781, 0.0
  %v1798 = vmax.f32 %v1782, 0.0
  %v1799 = vmax.f32 %v1783, 0.0
  %v1800 = vmax.f32 %v1784, 0.0
  %v1801 = vmax.f32 %v1785, 0.0
  %v1802 = vmax.f32 %v1786, 0.0
  %v1803 = vmax.f32 %v1787, 0.0
  %v1804 = vmax.f32 %v1788, 0.0
  %v1805 = vmax.f32 %v1789, 0.0
  %v1806 = vmax.f32 %v1790, 0.0
  %v1807 = vrot.slane %v1791, 7
  %v1808 = vrot.slane %v1792, 7
  %v1809 = vrot.slane %v1793, 7
  %v1810 = vrot.slane %v1794, 7
  %v1811 = vrot.slane %v1795, 7
  %v1812 = vrot.slane %v1796, 7
  %v1813 = vrot.slane %v1797, 7
  %v1814 = vrot.slane %v1798, 7
  %v1815 = vrot.slane %v1799, 7
  %v1816 = vrot.slane %v1800, 7
  %v1817 = vrot.slane %v1801, 7
  %v1818 = vrot.slane %v1802, 7
  %v1819 = vrot.slane %v1803, 7
  %v1820 = vrot.slane %v1804, 7
  %v1821 = vrot.slane %v1805, 7
  %v1822 = vrot.slane %v1806, 7
  %v1823 = vsel %vm965, %v1821, %v1822
  %v1824 = vsel %vm965, %v1820, %v1821
  %v1825 = vsel %vm965, %v1819, %v1820
  %v1826 = vsel %vm965, %v1818, %v1819
  %v1827 = vsel %vm965, %v1817, %v1818
  %v1828 = vsel %vm965, %v1816, %v1817
  %v1829 = vsel %vm965, %v1815, %v1816
  %v1830 = vsel %vm965, %v1814, %v1815
  %v1831 = vsel %vm965, %v1813, %v1814
  %v1832 = vsel %vm965, %v1812, %v1813
  %v1833 = vsel %vm965, %v1811, %v1812
  %v1834 = vsel %vm965, %v1810, %v1811
  %v1835 = vsel %vm965, %v1809, %v1810
  %v1836 = vsel %vm965, %v1808, %v1809
  %v1837 = vsel %vm965, %v1807, %v1808
  %v1838 = vsel %vm965, %v1822, %v1807
  %v1839 = vsel %vm998, 0.0, %v1838
  %v1840 = vsel %vm999, 0.0, %v1837
  %v1841 = vsel %vm1000, 0.0, %v1836
  %v1842 = vsel %vm1001, 0.0, %v1835
  %v1843 = vsel %vm1002, 0.0, %v1834
  %v1844 = vsel %vm1003, 0.0, %v1833
  %v1845 = vsel %vm1004, 0.0, %v1832
  %v1846 = vsel %vm1005, 0.0, %v1831
  %v1847 = vsel %vm1006, 0.0, %v1830
  %v1848 = vsel %vm1007, 0.0, %v1829
  %v1849 = vsel %vm1008, 0.0, %v1828
  %v1850 = vsel %vm1009, 0.0, %v1827
  %v1851 = vsel %vm1010, 0.0, %v1826
  %v1852 = vsel %vm1011, 0.0, %v1825
  %v1853 = vsel %vm1012, 0.0, %v1824
  %v1854 = vsel %vm1013, 0.0, %v1823
  %v1855 = vrot.slane %v1791, 1
  %v1856 = vrot.slane %v1792, 1
  %v1857 = vrot.slane %v1793, 1
  %v1858 = vrot.slane %v1794, 1
  %v1859 = vrot.slane %v1795, 1
  %v1860 = vrot.slane %v1796, 1
  %v1861 = vrot.slane %v1797, 1
  %v1862 = vrot.slane %v1798, 1
  %v1863 = vrot.slane %v1799, 1
  %v1864 = vrot.slane %v1800, 1
  %v1865 = vrot.slane %v1801, 1
  %v1866 = vrot.slane %v1802, 1
  %v1867 = vrot.slane %v1803, 1
  %v1868 = vrot.slane %v1804, 1
  %v1869 = vrot.slane %v1805, 1
  %v1870 = vrot.slane %v1806, 1
  %v1871 = vsel %vm1046, %v1869, %v1870
  %v1872 = vsel %vm1046, %v1868, %v1869
  %v1873 = vsel %vm1046, %v1867, %v1868
  %v1874 = vsel %vm1046, %v1866, %v1867
  %v1875 = vsel %vm1046, %v1865, %v1866
  %v1876 = vsel %vm1046, %v1864, %v1865
  %v1877 = vsel %vm1046, %v1863, %v1864
  %v1878 = vsel %vm1046, %v1862, %v1863
  %v1879 = vsel %vm1046, %v1861, %v1862
  %v1880 = vsel %vm1046, %v1860, %v1861
  %v1881 = vsel %vm1046, %v1859, %v1860
  %v1882 = vsel %vm1046, %v1858, %v1859
  %v1883 = vsel %vm1046, %v1857, %v1858
  %v1884 = vsel %vm1046, %v1856, %v1857
  %v1885 = vsel %vm1046, %v1855, %v1856
  %v1886 = vsel %vm1046, %v1870, %v1855
  %v1887 = vsel %vm1079, 0.0, %v1885
  %v1888 = vsel %vm1080, 0.0, %v1884
  %v1889 = vsel %vm1081, 0.0, %v1883
  %v1890 = vsel %vm1082, 0.0, %v1882
  %v1891 = vsel %vm1083, 0.0, %v1881
  %v1892 = vsel %vm1084, 0.0, %v1880
  %v1893 = vsel %vm1085, 0.0, %v1879
  %v1894 = vsel %vm1086, 0.0, %v1878
  %v1895 = vsel %vm1087, 0.0, %v1877
  %v1896 = vsel %vm1088, 0.0, %v1876
  %v1897 = vsel %vm1089, 0.0, %v1875
  %v1898 = vsel %vm1090, 0.0, %v1874
  %v1899 = vsel %vm1091, 0.0, %v1873
  %v1900 = vsel %vm1092, 0.0, %v1872
  %v1901 = vsel %vm1093, 0.0, %v1871
  %v1902 = vsel %vm1094, 0.0, %v1886
  %v1903 = vpack.c.bf16 %v1839, %v1839
  %v1904 = vpack.c.bf16 %v1840, %v1840
  %v1905 = vpack.c.bf16 %v1841, %v1841
  %v1906 = vpack.c.bf16 %v1842, %v1842
  %v1907 = vpack.c.bf16 %v1843, %v1843
  %v1908 = vpack.c.bf16 %v1844, %v1844
  %v1909 = vpack.c.bf16 %v1845, %v1845
  %v1910 = vpack.c.bf16 %v1846, %v1846
  %v1911 = vpack.c.bf16 %v1847, %v1847
  %v1912 = vpack.c.bf16 %v1848, %v1848
  %v1913 = vpack.c.bf16 %v1849, %v1849
  %v1914 = vpack.c.bf16 %v1850, %v1850
  %v1915 = vpack.c.bf16 %v1851, %v1851
  %v1916 = vpack.c.bf16 %v1852, %v1852
  %v1917 = vpack.c.bf16 %v1853, %v1853
  %v1918 = vpack.c.bf16 %v1854, %v1854
  %v1919 = vpack.c.bf16 %v1791, %v1791
  %v1920 = vpack.c.bf16 %v1792, %v1792
  %v1921 = vpack.c.bf16 %v1793, %v1793
  %v1922 = vpack.c.bf16 %v1794, %v1794
  %v1923 = vpack.c.bf16 %v1795, %v1795
  %v1924 = vpack.c.bf16 %v1796, %v1796
  %v1925 = vpack.c.bf16 %v1797, %v1797
  %v1926 = vpack.c.bf16 %v1798, %v1798
  %v1927 = vpack.c.bf16 %v1799, %v1799
  %v1928 = vpack.c.bf16 %v1800, %v1800
  %v1929 = vpack.c.bf16 %v1801, %v1801
  %v1930 = vpack.c.bf16 %v1802, %v1802
  %v1931 = vpack.c.bf16 %v1803, %v1803
  %v1932 = vpack.c.bf16 %v1804, %v1804
  %v1933 = vpack.c.bf16 %v1805, %v1805
  %v1934 = vpack.c.bf16 %v1806, %v1806
  %v1935 = vpack.c.bf16 %v1887, %v1887
  %v1936 = vpack.c.bf16 %v1888, %v1888
  %v1937 = vpack.c.bf16 %v1889, %v1889
  %v1938 = vpack.c.bf16 %v1890, %v1890
  %v1939 = vpack.c.bf16 %v1891, %v1891
  %v1940 = vpack.c.bf16 %v1892, %v1892
  %v1941 = vpack.c.bf16 %v1893, %v1893
  %v1942 = vpack.c.bf16 %v1894, %v1894
  %v1943 = vpack.c.bf16 %v1895, %v1895
  %v1944 = vpack.c.bf16 %v1896, %v1896
  %v1945 = vpack.c.bf16 %v1897, %v1897
  %v1946 = vpack.c.bf16 %v1898, %v1898
  %v1947 = vpack.c.bf16 %v1899, %v1899
  %v1948 = vpack.c.bf16 %v1900, %v1900
  %v1949 = vpack.c.bf16 %v1901, %v1901
  %v1950 = vpack.c.bf16 %v1902, %v1902
  %v1967 = vunpack.c.l.b16 %v1903
  %v1968 = vunpack.c.l.b16 %v1904
  %v1969 = vunpack.c.l.b16 %v1905
  %v1970 = vunpack.c.l.b16 %v1906
  %v1971 = vunpack.c.l.b16 %v1907
  %v1972 = vunpack.c.l.b16 %v1908
  %v1973 = vunpack.c.l.b16 %v1909
  %v1974 = vunpack.c.l.b16 %v1910
  %v1975 = vunpack.c.l.b16 %v1911
  %v1976 = vunpack.c.l.b16 %v1912
  %v1977 = vunpack.c.l.b16 %v1913
  %v1978 = vunpack.c.l.b16 %v1914
  %v1979 = vunpack.c.l.b16 %v1915
  %v1980 = vunpack.c.l.b16 %v1916
  %v1981 = vunpack.c.l.b16 %v1917
  %v1982 = vunpack.c.l.b16 %v1918
  %v1983 = vpack.c.b16 %v1968, %v1967
  %v1984 = vpack.c.b16 %v1970, %v1969
  %v1985 = vpack.c.b16 %v1972, %v1971
  %v1986 = vpack.c.b16 %v1974, %v1973
  %v1987 = vpack.c.b16 %v1976, %v1975
  %v1988 = vpack.c.b16 %v1978, %v1977
  %v1989 = vpack.c.b16 %v1980, %v1979
  %v1990 = vpack.c.b16 %v1982, %v1981
  %v2015 = vunpack.c.l.b16 %v1919
  %v2016 = vunpack.c.l.b16 %v1920
  %v2017 = vunpack.c.l.b16 %v1921
  %v2018 = vunpack.c.l.b16 %v1922
  %v2019 = vunpack.c.l.b16 %v1923
  %v2020 = vunpack.c.l.b16 %v1924
  %v2021 = vunpack.c.l.b16 %v1925
  %v2022 = vunpack.c.l.b16 %v1926
  %v2023 = vunpack.c.l.b16 %v1927
  %v2024 = vunpack.c.l.b16 %v1928
  %v2025 = vunpack.c.l.b16 %v1929
  %v2026 = vunpack.c.l.b16 %v1930
  %v2027 = vunpack.c.l.b16 %v1931
  %v2028 = vunpack.c.l.b16 %v1932
  %v2029 = vunpack.c.l.b16 %v1933
  %v2030 = vunpack.c.l.b16 %v1934
  %v2031 = vpack.c.b16 %v2016, %v2015
  %v2032 = vpack.c.b16 %v2018, %v2017
  %v2033 = vpack.c.b16 %v2020, %v2019
  %v2034 = vpack.c.b16 %v2022, %v2021
  %v2035 = vpack.c.b16 %v2024, %v2023
  %v2036 = vpack.c.b16 %v2026, %v2025
  %v2037 = vpack.c.b16 %v2028, %v2027
  %v2038 = vpack.c.b16 %v2030, %v2029
  %v2063 = vunpack.c.l.b16 %v1935
  %v2064 = vunpack.c.l.b16 %v1936
  %v2065 = vunpack.c.l.b16 %v1937
  %v2066 = vunpack.c.l.b16 %v1938
  %v2067 = vunpack.c.l.b16 %v1939
  %v2068 = vunpack.c.l.b16 %v1940
  %v2069 = vunpack.c.l.b16 %v1941
  %v2070 = vunpack.c.l.b16 %v1942
  %v2071 = vunpack.c.l.b16 %v1943
  %v2072 = vunpack.c.l.b16 %v1944
  %v2073 = vunpack.c.l.b16 %v1945
  %v2074 = vunpack.c.l.b16 %v1946
  %v2075 = vunpack.c.l.b16 %v1947
  %v2076 = vunpack.c.l.b16 %v1948
  %v2077 = vunpack.c.l.b16 %v1949
  %v2078 = vunpack.c.l.b16 %v1950
  %v2079 = vpack.c.b16 %v2064, %v2063
  %v2080 = vpack.c.b16 %v2066, %v2065
  %v2081 = vpack.c.b16 %v2068, %v2067
  %v2082 = vpack.c.b16 %v2070, %v2069
  %v2083 = vpack.c.b16 %v2072, %v2071
  %v2084 = vpack.c.b16 %v2074, %v2073
  %v2085 = vpack.c.b16 %v2076, %v2075
  %v2086 = vpack.c.b16 %v2078, %v2077
  %v2095 = vld [vmem:[%s2] sm:$0xf]
  %v2096 = vld [vmem:[%s2 + $0x4] sm:$0xf]
  %v2097 = vld [vmem:[%s2 + $0x8] sm:$0xf]
  %v2098 = vld [vmem:[%s2 + $0xc] sm:$0xf]
  %v2099 = vld [vmem:[%s2 + $0x10] sm:$0xf]
  %v2100 = vld [vmem:[%s2 + $0x14] sm:$0xf]
  %v2101 = vld [vmem:[%s2 + $0x18] sm:$0xf]
  %v2102 = vld [vmem:[%s2 + $0x1c] sm:$0xf]
  %v2103 = vld [vmem:[%s2 + $0x20] sm:$0xf]
  %v2104 = vld [vmem:[%s2 + $0x24] sm:$0xf]
  %v2105 = vld [vmem:[%s2 + $0x28] sm:$0xf]
  %v2106 = vld [vmem:[%s2 + $0x2c] sm:$0xf]
  %v2107 = vld [vmem:[%s2 + $0x30] sm:$0xf]
  %v2108 = vld [vmem:[%s2 + $0x34] sm:$0xf]
  %v2109 = vld [vmem:[%s2 + $0x38] sm:$0xf]
  %v2110 = vld [vmem:[%s2 + $0x3c] sm:$0xf]
  %v2111 = vld [vmem:[%s2 + $0x40] sm:$0xf]
  %v2112 = vld [vmem:[%s2 + $0x44] sm:$0xf]
  %v2113 = vld [vmem:[%s2 + $0x48] sm:$0xf]
  %v2114 = vld [vmem:[%s2 + $0x4c] sm:$0xf]
  %v2115 = vld [vmem:[%s2 + $0x50] sm:$0xf]
  %v2116 = vld [vmem:[%s2 + $0x54] sm:$0xf]
  %v2117 = vld [vmem:[%s2 + $0x58] sm:$0xf]
  %v2118 = vld [vmem:[%s2 + $0x5c] sm:$0xf]
  %v2119 = vld [vmem:[%s2 + $0x60] sm:$0xf]
  %v2120 = vld [vmem:[%s2 + $0x64] sm:$0xf]
  %v2121 = vld [vmem:[%s2 + $0x68] sm:$0xf]
  %v2122 = vld [vmem:[%s2 + $0x6c] sm:$0xf]
  %v2123 = vld [vmem:[%s2 + $0x70] sm:$0xf]
  %v2124 = vld [vmem:[%s2 + $0x74] sm:$0xf]
  %v2125 = vld [vmem:[%s2 + $0x78] sm:$0xf]
  %v2126 = vld [vmem:[%s2 + $0x7c] sm:$0xf]
  %v2127 = vld [vmem:[%s2 + $0x80] sm:$0xf]
  %v2128 = vld [vmem:[%s2 + $0x84] sm:$0xf]
  %v2129 = vld [vmem:[%s2 + $0x88] sm:$0xf]
  %v2130 = vld [vmem:[%s2 + $0x8c] sm:$0xf]
  %v2131 = vld [vmem:[%s2 + $0x90] sm:$0xf]
  %v2132 = vld [vmem:[%s2 + $0x94] sm:$0xf]
  %v2133 = vld [vmem:[%s2 + $0x98] sm:$0xf]
  %v2134 = vld [vmem:[%s2 + $0x9c] sm:$0xf]
  %v2135 = vld [vmem:[%s2 + $0xa0] sm:$0xf]
  %v2136 = vld [vmem:[%s2 + $0xa4] sm:$0xf]
  %v2137 = vld [vmem:[%s2 + $0xa8] sm:$0xf]
  %v2138 = vld [vmem:[%s2 + $0xac] sm:$0xf]
  %v2139 = vld [vmem:[%s2 + $0xb0] sm:$0xf]
  %v2140 = vld [vmem:[%s2 + $0xb4] sm:$0xf]
  %v2141 = vld [vmem:[%s2 + $0xb8] sm:$0xf]
  %v2142 = vld [vmem:[%s2 + $0xbc] sm:$0xf]
  %v2191 = vunpack.c.l.b16 %v2095
  %v2192 = vunpack.c.l.b16 %v2096
  %v2193 = vunpack.c.l.b16 %v2097
  %v2194 = vunpack.c.l.b16 %v2098
  %v2195 = vunpack.c.l.b16 %v2099
  %v2196 = vunpack.c.l.b16 %v2100
  %v2197 = vunpack.c.l.b16 %v2101
  %v2198 = vunpack.c.l.b16 %v2102
  %v2199 = vunpack.c.l.b16 %v2103
  %v2200 = vunpack.c.l.b16 %v2104
  %v2201 = vunpack.c.l.b16 %v2105
  %v2202 = vunpack.c.l.b16 %v2106
  %v2203 = vunpack.c.l.b16 %v2107
  %v2204 = vunpack.c.l.b16 %v2108
  %v2205 = vunpack.c.l.b16 %v2109
  %v2206 = vunpack.c.l.b16 %v2110
  %v2207 = vunpack.c.l.b16 %v2111
  %v2208 = vunpack.c.l.b16 %v2112
  %v2209 = vunpack.c.l.b16 %v2113
  %v2210 = vunpack.c.l.b16 %v2114
  %v2211 = vunpack.c.l.b16 %v2115
  %v2212 = vunpack.c.l.b16 %v2116
  %v2213 = vunpack.c.l.b16 %v2117
  %v2214 = vunpack.c.l.b16 %v2118
  %v2215 = vunpack.c.l.b16 %v2119
  %v2216 = vunpack.c.l.b16 %v2120
  %v2217 = vunpack.c.l.b16 %v2121
  %v2218 = vunpack.c.l.b16 %v2122
  %v2219 = vunpack.c.l.b16 %v2123
  %v2220 = vunpack.c.l.b16 %v2124
  %v2221 = vunpack.c.l.b16 %v2125
  %v2222 = vunpack.c.l.b16 %v2126
  %v2223 = vunpack.c.l.b16 %v2127
  %v2224 = vunpack.c.l.b16 %v2128
  %v2225 = vunpack.c.l.b16 %v2129
  %v2226 = vunpack.c.l.b16 %v2130
  %v2227 = vunpack.c.l.b16 %v2131
  %v2228 = vunpack.c.l.b16 %v2132
  %v2229 = vunpack.c.l.b16 %v2133
  %v2230 = vunpack.c.l.b16 %v2134
  %v2231 = vunpack.c.l.b16 %v2135
  %v2232 = vunpack.c.l.b16 %v2136
  %v2233 = vunpack.c.l.b16 %v2137
  %v2234 = vunpack.c.l.b16 %v2138
  %v2235 = vunpack.c.l.b16 %v2139
  %v2236 = vunpack.c.l.b16 %v2140
  %v2237 = vunpack.c.l.b16 %v2141
  %v2238 = vunpack.c.l.b16 %v2142
  %v2239 = vpack.c.b16 %v2192, %v2191
  %v2240 = vpack.c.b16 %v2194, %v2193
  %v2241 = vpack.c.b16 %v2196, %v2195
  %v2242 = vpack.c.b16 %v2198, %v2197
  %v2243 = vpack.c.b16 %v2200, %v2199
  %v2244 = vpack.c.b16 %v2202, %v2201
  %v2245 = vpack.c.b16 %v2204, %v2203
  %v2246 = vpack.c.b16 %v2206, %v2205
  %v2247 = vpack.c.b16 %v2208, %v2207
  %v2248 = vpack.c.b16 %v2210, %v2209
  %v2249 = vpack.c.b16 %v2212, %v2211
  %v2250 = vpack.c.b16 %v2214, %v2213
  %v2251 = vpack.c.b16 %v2216, %v2215
  %v2252 = vpack.c.b16 %v2218, %v2217
  %v2253 = vpack.c.b16 %v2220, %v2219
  %v2254 = vpack.c.b16 %v2222, %v2221
  %v2255 = vpack.c.b16 %v2224, %v2223
  %v2256 = vpack.c.b16 %v2226, %v2225
  %v2257 = vpack.c.b16 %v2228, %v2227
  %v2258 = vpack.c.b16 %v2230, %v2229
  %v2259 = vpack.c.b16 %v2232, %v2231
  %v2260 = vpack.c.b16 %v2234, %v2233
  %v2261 = vpack.c.b16 %v2236, %v2235
  %v2262 = vpack.c.b16 %v2238, %v2237
  %2287 = vmatpush.bf16.msra.mxu0 %v2246
  %2288 = vmatpush.bf16.msra.mxu0 %v2245
  %2289 = vmatpush.bf16.msra.mxu0 %v2244
  %2290 = vmatpush.bf16.msra.mxu0 %v2243
  %2291 = vmatpush.bf16.msra.mxu0 %v2242
  %2292 = vmatpush.bf16.msra.mxu0 %v2241
  %2293 = vmatpush.bf16.msra.mxu0 %v2240
  %2294 = vmatpush.bf16.msra.mxu0 %v2239
  %2295 = vmatmul.bf16.gmra.mxu0 %v1983
  %v2296 = vpop.f32.mrf.mxu0
  %v2297 = vadd.f32 0.0, %v2296
  %v2298 = vpop.f32.mrf.mxu0
  %v2299 = vadd.f32 0.0, %v2298
  %2300 = vmatmul.bf16.gmra.mxu0 %v1984
  %v2301 = vpop.f32.mrf.mxu0
  %v2302 = vadd.f32 0.0, %v2301
  %v2303 = vpop.f32.mrf.mxu0
  %v2304 = vadd.f32 0.0, %v2303
  %2305 = vmatmul.bf16.gmra.mxu0 %v1985
  %v2306 = vpop.f32.mrf.mxu0
  %v2307 = vadd.f32 0.0, %v2306
  %v2308 = vpop.f32.mrf.mxu0
  %v2309 = vadd.f32 0.0, %v2308
  %2310 = vmatmul.bf16.gmra.mxu0 %v1986
  %v2311 = vpop.f32.mrf.mxu0
  %v2312 = vadd.f32 0.0, %v2311
  %v2313 = vpop.f32.mrf.mxu0
  %v2314 = vadd.f32 0.0, %v2313
  %2315 = vmatmul.bf16.gmra.mxu0 %v1987
  %v2316 = vpop.f32.mrf.mxu0
  %v2317 = vadd.f32 0.0, %v2316
  %v2318 = vpop.f32.mrf.mxu0
  %v2319 = vadd.f32 0.0, %v2318
  %2320 = vmatmul.bf16.gmra.mxu0 %v1988
  %v2321 = vpop.f32.mrf.mxu0
  %v2322 = vadd.f32 0.0, %v2321
  %v2323 = vpop.f32.mrf.mxu0
  %v2324 = vadd.f32 0.0, %v2323
  %2325 = vmatmul.bf16.gmra.mxu0 %v1989
  %v2326 = vpop.f32.mrf.mxu0
  %v2327 = vadd.f32 0.0, %v2326
  %v2328 = vpop.f32.mrf.mxu0
  %v2329 = vadd.f32 0.0, %v2328
  %2330 = vmatmul.bf16.gmra.mxu0 %v1990
  %v2331 = vpop.f32.mrf.mxu0
  %v2332 = vadd.f32 0.0, %v2331
  %v2333 = vpop.f32.mrf.mxu0
  %v2334 = vadd.f32 0.0, %v2333
  %2335 = vdwg.mxu0
  %2336 = vmatpush.bf16.msra.mxu0 %v2254
  %2337 = vmatpush.bf16.msra.mxu0 %v2253
  %2338 = vmatpush.bf16.msra.mxu0 %v2252
  %2339 = vmatpush.bf16.msra.mxu0 %v2251
  %2340 = vmatpush.bf16.msra.mxu0 %v2250
  %2341 = vmatpush.bf16.msra.mxu0 %v2249
  %2342 = vmatpush.bf16.msra.mxu0 %v2248
  %2343 = vmatpush.bf16.msra.mxu0 %v2247
  %2344 = vmatmul.bf16.gmra.mxu0 %v2031
  %v2345 = vpop.f32.mrf.mxu0
  %v2346 = vadd.f32 %v2297, %v2345
  %v2347 = vpop.f32.mrf.mxu0
  %v2348 = vadd.f32 %v2299, %v2347
  %2349 = vmatmul.bf16.gmra.mxu0 %v2032
  %v2350 = vpop.f32.mrf.mxu0
  %v2351 = vadd.f32 %v2302, %v2350
  %v2352 = vpop.f32.mrf.mxu0
  %v2353 = vadd.f32 %v2304, %v2352
  %2354 = vmatmul.bf16.gmra.mxu0 %v2033
  %v2355 = vpop.f32.mrf.mxu0
  %v2356 = vadd.f32 %v2307, %v2355
  %v2357 = vpop.f32.mrf.mxu0
  %v2358 = vadd.f32 %v2309, %v2357
  %2359 = vmatmul.bf16.gmra.mxu0 %v2034
  %v2360 = vpop.f32.mrf.mxu0
  %v2361 = vadd.f32 %v2312, %v2360
  %v2362 = vpop.f32.mrf.mxu0
  %v2363 = vadd.f32 %v2314, %v2362
  %2364 = vmatmul.bf16.gmra.mxu0 %v2035
  %v2365 = vpop.f32.mrf.mxu0
  %v2366 = vadd.f32 %v2317, %v2365
  %v2367 = vpop.f32.mrf.mxu0
  %v2368 = vadd.f32 %v2319, %v2367
  %2369 = vmatmul.bf16.gmra.mxu0 %v2036
  %v2370 = vpop.f32.mrf.mxu0
  %v2371 = vadd.f32 %v2322, %v2370
  %v2372 = vpop.f32.mrf.mxu0
  %v2373 = vadd.f32 %v2324, %v2372
  %2374 = vmatmul.bf16.gmra.mxu0 %v2037
  %v2375 = vpop.f32.mrf.mxu0
  %v2376 = vadd.f32 %v2327, %v2375
  %v2377 = vpop.f32.mrf.mxu0
  %v2378 = vadd.f32 %v2329, %v2377
  %2379 = vmatmul.bf16.gmra.mxu0 %v2038
  %v2380 = vpop.f32.mrf.mxu0
  %v2381 = vadd.f32 %v2332, %v2380
  %v2382 = vpop.f32.mrf.mxu0
  %v2383 = vadd.f32 %v2334, %v2382
  %2384 = vdwg.mxu0
  %2385 = vmatpush.bf16.msra.mxu0 %v2262
  %2386 = vmatpush.bf16.msra.mxu0 %v2261
  %2387 = vmatpush.bf16.msra.mxu0 %v2260
  %2388 = vmatpush.bf16.msra.mxu0 %v2259
  %2389 = vmatpush.bf16.msra.mxu0 %v2258
  %2390 = vmatpush.bf16.msra.mxu0 %v2257
  %2391 = vmatpush.bf16.msra.mxu0 %v2256
  %2392 = vmatpush.bf16.msra.mxu0 %v2255
  %2393 = vmatmul.bf16.gmra.mxu0 %v2079
  %v2394 = vpop.f32.mrf.mxu0
  %v2395 = vadd.f32 %v2346, %v2394
  %v2396 = vpop.f32.mrf.mxu0
  %v2397 = vadd.f32 %v2348, %v2396
  %2398 = vmatmul.bf16.gmra.mxu0 %v2080
  %v2399 = vpop.f32.mrf.mxu0
  %v2400 = vadd.f32 %v2351, %v2399
  %v2401 = vpop.f32.mrf.mxu0
  %v2402 = vadd.f32 %v2353, %v2401
  %2403 = vmatmul.bf16.gmra.mxu0 %v2081
  %v2404 = vpop.f32.mrf.mxu0
  %v2405 = vadd.f32 %v2356, %v2404
  %v2406 = vpop.f32.mrf.mxu0
  %v2407 = vadd.f32 %v2358, %v2406
  %2408 = vmatmul.bf16.gmra.mxu0 %v2082
  %v2409 = vpop.f32.mrf.mxu0
  %v2410 = vadd.f32 %v2361, %v2409
  %v2411 = vpop.f32.mrf.mxu0
  %v2412 = vadd.f32 %v2363, %v2411
  %2413 = vmatmul.bf16.gmra.mxu0 %v2083
  %v2414 = vpop.f32.mrf.mxu0
  %v2415 = vadd.f32 %v2366, %v2414
  %v2416 = vpop.f32.mrf.mxu0
  %v2417 = vadd.f32 %v2368, %v2416
  %2418 = vmatmul.bf16.gmra.mxu0 %v2084
  %v2419 = vpop.f32.mrf.mxu0
  %v2420 = vadd.f32 %v2371, %v2419
  %v2421 = vpop.f32.mrf.mxu0
  %v2422 = vadd.f32 %v2373, %v2421
  %2423 = vmatmul.bf16.gmra.mxu0 %v2085
  %v2424 = vpop.f32.mrf.mxu0
  %v2425 = vadd.f32 %v2376, %v2424
  %v2426 = vpop.f32.mrf.mxu0
  %v2427 = vadd.f32 %v2378, %v2426
  %2428 = vmatmul.bf16.gmra.mxu0 %v2086
  %v2429 = vpop.f32.mrf.mxu0
  %v2430 = vadd.f32 %v2381, %v2429
  %v2431 = vpop.f32.mrf.mxu0
  %v2432 = vadd.f32 %v2383, %v2431
  %2433 = vdwg.mxu0
  %v2434 = vadd.f32 %v2395, %v2397
  %v2435 = vadd.f32 %v2434, %v2400
  %v2436 = vadd.f32 %v2435, %v2402
  %v2437 = vadd.f32 %v2436, %v2405
  %v2438 = vadd.f32 %v2437, %v2407
  %v2439 = vadd.f32 %v2438, %v2410
  %v2440 = vadd.f32 %v2439, %v2412
  %v2441 = vadd.f32 %v2440, %v2415
  %v2442 = vadd.f32 %v2441, %v2417
  %v2443 = vadd.f32 %v2442, %v2420
  %v2444 = vadd.f32 %v2443, %v2422
  %v2445 = vadd.f32 %v2444, %v2425
  %v2446 = vadd.f32 %v2445, %v2427
  %v2447 = vadd.f32 %v2446, %v2430
  %v2448 = vadd.f32 %v2447, %v2432
  %v2449 = vrot.slane %v2448, 4
  %v2450 = vadd.f32 %v2448, %v2449
  %v2451 = vrot.slane %v2450, 2
  %v2452 = vadd.f32 %v2450, %v2451
  %v2453 = vrot.slane %v2452, 1
  %v2454 = vadd.f32 %v2452, %v2453
  %2455 = vrot.lane.b32.xlu0 %v2454, 8
  %v2456 = vpop.permute.xlu0 %2455
  %v2457 = vadd.f32 %v2454, %v2456
  %2458 = vrot.lane.b32.xlu0 %v2457, 16
  %v2459 = vpop.permute.xlu0 %2458
  %v2460 = vadd.f32 %v2457, %v2459
  %2461 = vrot.lane.b32.xlu0 %v2460, 32
  %v2462 = vpop.permute.xlu0 %2461
  %v2463 = vadd.f32 %v2460, %v2462
  %2464 = vrot.lane.b32.xlu0 %v2463, 64
  %v2465 = vpop.permute.xlu0 %2464
  %v2466 = vadd.f32 %v2463, %v2465
  %v2467 = vmul.f32 %v2395, %v2395
  %v2468 = vmul.f32 %v2397, %v2397
  %v2469 = vmul.f32 %v2400, %v2400
  %v2470 = vmul.f32 %v2402, %v2402
  %v2471 = vmul.f32 %v2405, %v2405
  %v2472 = vmul.f32 %v2407, %v2407
  %v2473 = vmul.f32 %v2410, %v2410
  %v2474 = vmul.f32 %v2412, %v2412
  %v2475 = vmul.f32 %v2415, %v2415
  %v2476 = vmul.f32 %v2417, %v2417
  %v2477 = vmul.f32 %v2420, %v2420
  %v2478 = vmul.f32 %v2422, %v2422
  %v2479 = vmul.f32 %v2425, %v2425
  %v2480 = vmul.f32 %v2427, %v2427
  %v2481 = vmul.f32 %v2430, %v2430
  %v2482 = vmul.f32 %v2432, %v2432
  %v2483 = vadd.f32 %v2467, %v2468
  %v2484 = vadd.f32 %v2483, %v2469
  %v2485 = vadd.f32 %v2484, %v2470
  %v2486 = vadd.f32 %v2485, %v2471
  %v2487 = vadd.f32 %v2486, %v2472
  %v2488 = vadd.f32 %v2487, %v2473
  %v2489 = vadd.f32 %v2488, %v2474
  %v2490 = vadd.f32 %v2489, %v2475
  %v2491 = vadd.f32 %v2490, %v2476
  %v2492 = vadd.f32 %v2491, %v2477
  %v2493 = vadd.f32 %v2492, %v2478
  %v2494 = vadd.f32 %v2493, %v2479
  %v2495 = vadd.f32 %v2494, %v2480
  %v2496 = vadd.f32 %v2495, %v2481
  %v2497 = vadd.f32 %v2496, %v2482
  %v2498 = vrot.slane %v2497, 4
  %v2499 = vadd.f32 %v2497, %v2498
  %v2500 = vrot.slane %v2499, 2
  %v2501 = vadd.f32 %v2499, %v2500
  %v2502 = vrot.slane %v2501, 1
  %v2503 = vadd.f32 %v2501, %v2502
  %2504 = vrot.lane.b32.xlu0 %v2503, 8
  %v2505 = vpop.permute.xlu0 %2504
  %v2506 = vadd.f32 %v2503, %v2505
  %2507 = vrot.lane.b32.xlu0 %v2506, 16
  %v2508 = vpop.permute.xlu0 %2507
  %v2509 = vadd.f32 %v2506, %v2508
  %2510 = vrot.lane.b32.xlu0 %v2509, 32
  %v2511 = vpop.permute.xlu0 %2510
  %v2512 = vadd.f32 %v2509, %v2511
  %2513 = vrot.lane.b32.xlu0 %v2512, 64
  %v2514 = vpop.permute.xlu0 %2513
  %v2515 = vadd.f32 %v2512, %v2514
  %v2516 = vmul.f32 %v2466, 0.00048828125
  %v2517 = vmul.f32 %v2515, 0.00048828125
  %v2518 = vmul.f32 %v2516, %v2516
  %v2519 = vsub.f32 %v2517, %v2518
  %v2520 = vadd.f32 %v2519, 1e-05
  %v2521 = vrsqrt.pop %v2520
  %v2522 = vmul.f32 %v2521, %v2520
  %v2523 = vmul.f32 %v2522, %v2521
  %v2524 = vmul.f32 0.5, %v2523
  %v2525 = vsub.f32 1.5, %v2524
  %v2526 = vmul.f32 %v2521, %v2525
  %vm2527 = vweird.f32 %v2520
  %vm2528 = vweird.f32 %v2521
  %vm2529 = vmor %vm2527, %vm2528
  %v2530 = vsel %vm2529, %v2521, %v2526
  %v2531 = vperm.slane %v2516, 0
  %v2532 = vsub.f32 %v2395, %v2531
  %v2533 = vsub.f32 %v2397, %v2531
  %v2534 = vsub.f32 %v2400, %v2531
  %v2535 = vsub.f32 %v2402, %v2531
  %v2536 = vsub.f32 %v2405, %v2531
  %v2537 = vsub.f32 %v2407, %v2531
  %v2538 = vsub.f32 %v2410, %v2531
  %v2539 = vsub.f32 %v2412, %v2531
  %v2540 = vsub.f32 %v2415, %v2531
  %v2541 = vsub.f32 %v2417, %v2531
  %v2542 = vsub.f32 %v2420, %v2531
  %v2543 = vsub.f32 %v2422, %v2531
  %v2544 = vsub.f32 %v2425, %v2531
  %v2545 = vsub.f32 %v2427, %v2531
  %v2546 = vsub.f32 %v2430, %v2531
  %v2547 = vsub.f32 %v2432, %v2531
  %v2548 = vmul.f32 %v2530, %v947
  %v2549 = vperm.slane %v2548, 0
  %v2550 = vmul.f32 %v2532, %v2549
  %v2551 = vmul.f32 %v2533, %v2549
  %v2552 = vmul.f32 %v2534, %v2549
  %v2553 = vmul.f32 %v2535, %v2549
  %v2554 = vmul.f32 %v2536, %v2549
  %v2555 = vmul.f32 %v2537, %v2549
  %v2556 = vmul.f32 %v2538, %v2549
  %v2557 = vmul.f32 %v2539, %v2549
  %v2558 = vmul.f32 %v2540, %v2549
  %v2559 = vmul.f32 %v2541, %v2549
  %v2560 = vmul.f32 %v2542, %v2549
  %v2561 = vmul.f32 %v2543, %v2549
  %v2562 = vmul.f32 %v2544, %v2549
  %v2563 = vmul.f32 %v2545, %v2549
  %v2564 = vmul.f32 %v2546, %v2549
  %v2565 = vmul.f32 %v2547, %v2549
  %v2566 = vperm.slane %v948, 0
  %v2567 = vadd.f32 %v2550, %v2566
  %v2568 = vadd.f32 %v2551, %v2566
  %v2569 = vadd.f32 %v2552, %v2566
  %v2570 = vadd.f32 %v2553, %v2566
  %v2571 = vadd.f32 %v2554, %v2566
  %v2572 = vadd.f32 %v2555, %v2566
  %v2573 = vadd.f32 %v2556, %v2566
  %v2574 = vadd.f32 %v2557, %v2566
  %v2575 = vadd.f32 %v2558, %v2566
  %v2576 = vadd.f32 %v2559, %v2566
  %v2577 = vadd.f32 %v2560, %v2566
  %v2578 = vadd.f32 %v2561, %v2566
  %v2579 = vadd.f32 %v2562, %v2566
  %v2580 = vadd.f32 %v2563, %v2566
  %v2581 = vadd.f32 %v2564, %v2566
  %v2582 = vadd.f32 %v2565, %v2566
  %v2583 = vadd.f32 %v2567, %v809
  %v2584 = vadd.f32 %v2568, %v810
  %v2585 = vadd.f32 %v2569, %v811
  %v2586 = vadd.f32 %v2570, %v812
  %v2587 = vadd.f32 %v2571, %v813
  %v2588 = vadd.f32 %v2572, %v814
  %v2589 = vadd.f32 %v2573, %v815
  %v2590 = vadd.f32 %v2574, %v816
  %v2591 = vadd.f32 %v2575, %v817
  %v2592 = vadd.f32 %v2576, %v818
  %v2593 = vadd.f32 %v2577, %v819
  %v2594 = vadd.f32 %v2578, %v820
  %v2595 = vadd.f32 %v2579, %v821
  %v2596 = vadd.f32 %v2580, %v822
  %v2597 = vadd.f32 %v2581, %v823
  %v2598 = vadd.f32 %v2582, %v824
  %v2599 = vmax.f32 %v2583, 0.0
  %v2600 = vmax.f32 %v2584, 0.0
  %v2601 = vmax.f32 %v2585, 0.0
  %v2602 = vmax.f32 %v2586, 0.0
  %v2603 = vmax.f32 %v2587, 0.0
  %v2604 = vmax.f32 %v2588, 0.0
  %v2605 = vmax.f32 %v2589, 0.0
  %v2606 = vmax.f32 %v2590, 0.0
  %v2607 = vmax.f32 %v2591, 0.0
  %v2608 = vmax.f32 %v2592, 0.0
  %v2609 = vmax.f32 %v2593, 0.0
  %v2610 = vmax.f32 %v2594, 0.0
  %v2611 = vmax.f32 %v2595, 0.0
  %v2612 = vmax.f32 %v2596, 0.0
  %v2613 = vmax.f32 %v2597, 0.0
  %v2614 = vmax.f32 %v2598, 0.0
  %2615 = vst [vmem:[%s4] sm:$0xff] %v2599
  %2616 = vst [vmem:[%s4 + $0x8] sm:$0xff] %v2600
  %2617 = vst [vmem:[%s4 + $0x10] sm:$0xff] %v2601
  %2618 = vst [vmem:[%s4 + $0x18] sm:$0xff] %v2602
  %2619 = vst [vmem:[%s4 + $0x20] sm:$0xff] %v2603
  %2620 = vst [vmem:[%s4 + $0x28] sm:$0xff] %v2604
  %2621 = vst [vmem:[%s4 + $0x30] sm:$0xff] %v2605
  %2622 = vst [vmem:[%s4 + $0x38] sm:$0xff] %v2606
  %2623 = vst [vmem:[%s4 + $0x40] sm:$0xff] %v2607
  %2624 = vst [vmem:[%s4 + $0x48] sm:$0xff] %v2608
  %2625 = vst [vmem:[%s4 + $0x50] sm:$0xff] %v2609
  %2626 = vst [vmem:[%s4 + $0x58] sm:$0xff] %v2610
  %2627 = vst [vmem:[%s4 + $0x60] sm:$0xff] %v2611
  %2628 = vst [vmem:[%s4 + $0x68] sm:$0xff] %v2612
  %2629 = vst [vmem:[%s4 + $0x70] sm:$0xff] %v2613
  %2630 = vst [vmem:[%s4 + $0x78] sm:$0xff] %v2614
  // Predicated region
  $region18: #{basic_block_forward.1} parent=0 // pred_check
    _
  $region19: #{basic_block_forward.1} parent=0 // pred_check_branch
    %2632 = sbr.rel (0) target = $region21
  $region20: #{basic_block_forward.1} parent=0 // pred_region
    _
  $region21: #{basic_block_forward.1} parent=0 // pred_fallthru
    _
  // Predicated region
  $region22: #{basic_block_forward.1} parent=0 // pred_check
    _
  $region23: #{basic_block_forward.1} parent=0 // pred_check_branch
    %2634 = sbr.rel (0) target = $region25
  $region24: #{basic_block_forward.1} parent=0 // pred_region
    _
  $region25: #{basic_block_forward.1} parent=0 // pred_fallthru
    _

</llo_original>
